<compile_context>
chip_gen: v7x
topology: tpu7x:2x2x1
jax: 0.10.0
libtpu: 0.0.40
codegen_flags: <defaults>
</compile_context>

<pallas_src>
import functools
import math

import jax
import jax.numpy as jnp
from jax.experimental import pallas as pl
from jax.experimental.pallas import tpu as pltpu


LANE = 128
VMEM_LIMIT_BYTES = 48 * 1024 * 1024   # below v7x's 64 MiB physical VMEM


# ----------------------------- Pallas kernels -----------------------------

def _linear_kernel(x_ref, w_ref, b_ref, o_ref, *, relu):
    # y = x @ W + b  (optionally ReLU); bf16 MXU inputs, f32 accumulate.
    y = jnp.dot(x_ref[...], w_ref[...], preferred_element_type=jnp.float32)
    y = y + b_ref[...].astype(jnp.float32)
    if relu:
        y = jnp.maximum(y, 0.0)
    o_ref[...] = y.astype(o_ref.dtype)


def _gcn_layer_kernel(scalars_ref, adj_ref, h_ref, h0_ref, w_ref, o_ref, acc_ref):
    # GraphConvolution (variant=False, residual=False) fused with ReLU:
    #   hi      = adj @ h                         (tiled k-reduction, MXU only)
    #   support = (1 - alpha) * hi + alpha * h0   (epilogue, once per row tile)
    #   out     = relu(theta * support @ W + (1 - theta) * support)
    k = pl.program_id(1)

    @pl.when(k == 0)
    def _init():
        acc_ref[...] = jnp.zeros_like(acc_ref)

    # Pure adj-block x h-block MXU accumulate in the inner k loop.
    acc_ref[...] += jnp.dot(adj_ref[...], h_ref[...],
                            preferred_element_type=jnp.float32)

    @pl.when(k == pl.num_programs(1) - 1)
    def _epilogue():
        theta = scalars_ref[0]
        alpha = scalars_ref[1]
        support = (1.0 - alpha) * acc_ref[...] + alpha * h0_ref[...].astype(jnp.float32)
        out = theta * jnp.dot(support.astype(jnp.bfloat16), w_ref[...],
                              preferred_element_type=jnp.float32)
        out = out + (1.0 - theta) * support
        o_ref[...] = jnp.maximum(out, 0.0).astype(o_ref.dtype)


# ----------------------------- wrappers ------------------------------------

def pallas_linear(x, w, b, *, relu, out_dtype, tm=128):
    n, fin = x.shape
    fout = w.shape[1]
    assert n % tm == 0
    return pl.pallas_call(
        functools.partial(_linear_kernel, relu=relu),
        out_shape=jax.ShapeDtypeStruct((n, fout), out_dtype),
        grid_spec=pltpu.PrefetchScalarGridSpec(
            num_scalar_prefetch=0,
            grid=(n // tm,),
            in_specs=[
                pl.BlockSpec((tm, fin), lambda i: (i, 0)),
                pl.BlockSpec((fin, fout), lambda i: (0, 0)),
                pl.BlockSpec((1, fout), lambda i: (0, 0)),
            ],
            out_specs=pl.BlockSpec((tm, fout), lambda i: (i, 0)),
        ),
        compiler_params=pltpu.CompilerParams(
            dimension_semantics=("parallel",),
            vmem_limit_bytes=VMEM_LIMIT_BYTES,
        ),
    )(x, w, b)


def pallas_gcn_layer(adj, h, h0, w, scalars, *, tm=128, tk=128):
    n, f = h.shape
    assert n % tm == 0 and n % tk == 0 and f % LANE == 0
    return pl.pallas_call(
        _gcn_layer_kernel,
        out_shape=jax.ShapeDtypeStruct((n, f), jnp.bfloat16),
        grid_spec=pltpu.PrefetchScalarGridSpec(
            num_scalar_prefetch=1,            # scalars = [theta, alpha] -> SMEM
            grid=(n // tm, n // tk),
            in_specs=[
                pl.BlockSpec((tm, tk), lambda i, k, s: (i, k)),   # adj tile
                pl.BlockSpec((tk, f), lambda i, k, s: (k, 0)),    # h tile
                pl.BlockSpec((tm, f), lambda i, k, s: (i, 0)),    # h0 (const over k)
                pl.BlockSpec((f, f), lambda i, k, s: (0, 0)),     # W  (resident)
            ],
            out_specs=pl.BlockSpec((tm, f), lambda i, k, s: (i, 0)),
            scratch_shapes=[pltpu.VMEM((tm, f), jnp.float32)],    # f32 accumulator
        ),
        compiler_params=pltpu.CompilerParams(
            dimension_semantics=("parallel", "arbitrary"),
            vmem_limit_bytes=VMEM_LIMIT_BYTES,
        ),
    )(scalars, adj, h, h0, w)


# ----------------------------- GCNII model ---------------------------------

def init_gcnii_params(key, in_feat, out_feat, hidden_layers):
    """Deterministic parameter init mirroring the PyTorch module's shapes."""
    nlayers = len(hidden_layers)
    nhidden = hidden_layers[0]
    params = {}

    # GraphConvolution weights: uniform(-stdv, stdv), stdv = 1/sqrt(out_features)
    conv_ws = []
    stdv = 1.0 / math.sqrt(nhidden)
    for _ in range(nlayers):
        key, sub = jax.random.split(key)
        conv_ws.append(jax.random.uniform(
            sub, (nhidden, nhidden), jnp.float32, minval=-stdv, maxval=stdv))
    params["conv_ws"] = conv_ws

    # fcs[0]: Linear(in_feat, nhidden); fcs[1]: Linear(nhidden, out_feat)
    def linear_init(key, fan_in, fan_out):
        k1, k2 = jax.random.split(key)
        bound = 1.0 / math.sqrt(fan_in)
        w = jax.random.uniform(k1, (fan_in, fan_out), jnp.float32,
                               minval=-bound, maxval=bound)
        b = jax.random.uniform(k2, (1, fan_out), jnp.float32,
                               minval=-bound, maxval=bound)
        return w, b

    key, k_in, k_out = jax.random.split(key, 3)
    params["fc_in_w"], params["fc_in_b"] = linear_init(k_in, in_feat, nhidden)
    params["fc_out_w"], params["fc_out_b"] = linear_init(k_out, nhidden, out_feat)
    return params


def _round_up(v, m):
    return ((v + m - 1) // m) * m


def _pad_to(a, shape):
    pads = [(0, s - d) for d, s in zip(a.shape, shape)]
    if all(p == (0, 0) for p in pads):
        return a
    return jnp.pad(a, pads)


def gcnii_forward(params, x, adj, *, lamda, alpha, tm=128, tk=128):
    """GCNII forward pass (dropout=0 / eval mode, act_fn = ReLU)."""
    # TODO(synk): F.dropout with dropout>0 in training mode not implemented
    # (dropout defaults to 0, so eval-mode forward is exact).
    n, in_feat = x.shape
    nhidden = params["conv_ws"][0].shape[0]
    out_feat = params["fc_out_w"].shape[1]
    assert nhidden % LANE == 0, "hidden width must be a multiple of 128 lanes"

    n_p = _round_up(n, math.lcm(tm, tk))
    fin_p = _round_up(in_feat, LANE)
    fout_p = _round_up(out_feat, LANE)

    bf16 = jnp.bfloat16
    x_p = _pad_to(x, (n_p, fin_p)).astype(bf16)
    adj_p = _pad_to(adj, (n_p, n_p)).astype(bf16)
    w_in = _pad_to(params["fc_in_w"], (fin_p, nhidden)).astype(bf16)
    b_in = params["fc_in_b"]                                   # (1, nhidden) f32
    w_out = _pad_to(params["fc_out_w"], (nhidden, fout_p)).astype(bf16)
    b_out = _pad_to(params["fc_out_b"], (1, fout_p))           # f32

    # Input linear + ReLU (output stays bf16 and feeds the conv stack as h/h0).
    h = pallas_linear(x_p, w_in, b_in, relu=True, out_dtype=bf16, tm=tm)
    h0 = h

    for i, w in enumerate(params["conv_ws"]):
        theta = math.log(lamda / (i + 1) + 1.0)
        scalars = jnp.array([theta, alpha], jnp.float32)
        h = pallas_gcn_layer(adj_p, h, h0, w.astype(bf16), scalars, tm=tm, tk=tk)

    out = pallas_linear(h, w_out, b_out, relu=False, out_dtype=jnp.float32, tm=tm)
    return out[:n, :out_feat]


# ----------------------------- reference (pure JAX) -------------------------

def gcnii_reference(params, x, adj, *, lamda, alpha):
    """Pure-JAX reference mirroring the kernel's bf16-input / f32-accum numerics."""
    bf = lambda a: a.astype(jnp.bfloat16)
    f32 = jnp.float32
    h = jnp.dot(bf(x), bf(params["fc_in_w"]), preferred_element_type=f32)
    h = jnp.maximum(h + params["fc_in_b"], 0.0).astype(jnp.bfloat16)
    h0 = h
    for i, w in enumerate(params["conv_ws"]):
        theta = math.log(lamda / (i + 1) + 1.0)
        hi = jnp.dot(bf(adj), h, preferred_element_type=f32)
        support = (1.0 - alpha) * hi + alpha * h0.astype(f32)
        out = theta * jnp.dot(bf(support), bf(w), preferred_element_type=f32)
        out = out + (1.0 - theta) * support
        h = jnp.maximum(out, 0.0).astype(jnp.bfloat16)
    return jnp.dot(h, bf(params["fc_out_w"]), preferred_element_type=f32) + params["fc_out_b"]


# ----------------------------- main ------------------------------------------

if __name__ == "__main__":
    key = jax.random.PRNGKey(0)

    # Small synthetic graph (node dim exercises 2 row tiles x 2 k tiles, and
    # in/out feature dims exercise the lane-padding path).
    N = 256
    in_feat = 64
    out_feat = 16
    hidden_layers = [128, 128]   # 2 GCNII layers, nhidden = 128 (lane-dense)
    lamda = 0.5
    alpha = 0.1

    key, kx, ka, kp = jax.random.split(key, 4)
    x = jax.random.normal(kx, (N, in_feat), jnp.float32)

    # Symmetric row-normalized adjacency (dense).
    a = jax.random.uniform(ka, (N, N), jnp.float32)
    a = (a > 0.9).astype(jnp.float32)
    a = jnp.minimum(a + a.T + jnp.eye(N, dtype=jnp.float32), 1.0)
    deg = jnp.sum(a, axis=1, keepdims=True)
    adj = a / deg

    params = init_gcnii_params(kp, in_feat, out_feat, hidden_layers)

    fwd = jax.jit(functools.partial(gcnii_forward, lamda=lamda, alpha=alpha))
    out = jax.block_until_ready(fwd(params, x, adj))

    ref = gcnii_reference(params, x, adj, lamda=lamda, alpha=alpha)
    assert out.shape == (N, out_feat)
    err = jnp.max(jnp.abs(out - ref))
    assert err < 5e-2, f"mismatch vs reference: max abs err {err}"

    print("KERNEL_OK")
</pallas_src>

<mosaic_0001>
module attributes {stable_mosaic.version = 11 : i64} {
  func.func @_gcn_layer_kernel(%arg0: i32, %arg1: i32, %arg2: memref<2xf32, #tpu.memory_space<smem>>, %arg3: memref<128x128xbf16, #tpu.memory_space<vmem>>, %arg4: memref<128x128xbf16, #tpu.memory_space<vmem>>, %arg5: memref<128x128xbf16, #tpu.memory_space<vmem>>, %arg6: memref<128x128xbf16, #tpu.memory_space<vmem>>, %arg7: memref<128x128xbf16, #tpu.memory_space<vmem>>, %arg8: memref<128x128xf32, #tpu.memory_space<vmem>>) attributes {dimension_semantics = [#tpu.dimension_semantics<parallel>, #tpu.dimension_semantics<arbitrary>], iteration_bounds = array<i64: 2, 2>, scalar_prefetch = 1 : i64, scratch_operands = 1 : i64, tpu.core_type = #tpu.core_type<tc>, window_params = [{transform_indices = @transform_0, window_bounds = array<i64: 128, 128>}, {transform_indices = @transform_1, window_bounds = array<i64: 128, 128>}, {transform_indices = @transform_2, window_bounds = array<i64: 128, 128>}, {pipeline_mode = #tpu.pipeline_mode<synchronous>, transform_indices = @transform_3, window_bounds = array<i64: 128, 128>}, {transform_indices = @transform_4, window_bounds = array<i64: 128, 128>}]} {
    %c0_i32 = arith.constant 0 : i32
    %0 = arith.cmpi eq, %arg1, %c0_i32 : i32
    %1 = arith.extui %0 : i1 to i32
    %c0_i32_0 = arith.constant 0 : i32
    %2 = arith.cmpi ne, %1, %c0_i32_0 : i32
    scf.if %2 {
      %cst_9 = arith.constant 0.000000e+00 : f32
      %12 = vector.broadcast %cst_9 : f32 to vector<128x128xf32>
      %c0_10 = arith.constant 0 : index
      %c0_11 = arith.constant 0 : index
      %13 = vector.load %arg8[%c0_10, %c0_11] : memref<128x128xf32, #tpu.memory_space<vmem>>, vector<128x128xf32>
      tpu.vector_store %arg8[%c0_10, %c0_11], %12 {strides = array<i32>} : memref<128x128xf32, #tpu.memory_space<vmem>>, vector<128x128xf32>,
    } else {
    }
    %c0 = arith.constant 0 : index
    %c0_1 = arith.constant 0 : index
    %3 = vector.load %arg8[%c0, %c0_1] : memref<128x128xf32, #tpu.memory_space<vmem>>, vector<128x128xf32>
    %c0_2 = arith.constant 0 : index
    %c0_3 = arith.constant 0 : index
    %4 = vector.load %arg3[%c0_2, %c0_3] : memref<128x128xbf16, #tpu.memory_space<vmem>>, vector<128x128xbf16>
    %c0_4 = arith.constant 0 : index
    %c0_5 = arith.constant 0 : index
    %5 = vector.load %arg4[%c0_4, %c0_5] : memref<128x128xbf16, #tpu.memory_space<vmem>>, vector<128x128xbf16>
    %cst = arith.constant dense<0.000000e+00> : vector<128x128xf32>
    %6 = tpu.matmul %4, %5, %cst {dimension_numbers = #tpu.dot_dimension_numbers<[1], [0], [0], [1], [0, 0, 1, 1], [], []>} : vector<128x128xbf16>, vector<128x128xbf16>, vector<128x128xf32> -> vector<128x128xf32>
    %7 = arith.addf %3, %6 : vector<128x128xf32>
    %c0_6 = arith.constant 0 : index
    %c0_7 = arith.constant 0 : index
    %8 = vector.load %arg8[%c0_6, %c0_7] : memref<128x128xf32, #tpu.memory_space<vmem>>, vector<128x128xf32>
    tpu.vector_store %arg8[%c0_6, %c0_7], %7 {strides = array<i32>} : memref<128x128xf32, #tpu.memory_space<vmem>>, vector<128x128xf32>,
    %c1_i32 = arith.constant 1 : i32
    %9 = arith.cmpi eq, %arg1, %c1_i32 : i32
    %10 = arith.extui %9 : i1 to i32
    %c0_i32_8 = arith.constant 0 : i32
    %11 = arith.cmpi ne, %10, %c0_i32_8 : i32
    scf.if %11 {
      %c0_9 = arith.constant 0 : index
      %12 = memref.load %arg2[%c0_9] : memref<2xf32, #tpu.memory_space<smem>>
      %c1 = arith.constant 1 : index
      %13 = memref.load %arg2[%c1] : memref<2xf32, #tpu.memory_space<smem>>
      %cst_10 = arith.constant 1.000000e+00 : f32
      %14 = arith.subf %cst_10, %13 : f32
      %c0_11 = arith.constant 0 : index
      %c0_12 = arith.constant 0 : index
      %15 = vector.load %arg8[%c0_11, %c0_12] : memref<128x128xf32, #tpu.memory_space<vmem>>, vector<128x128xf32>
      %16 = vector.broadcast %14 : f32 to vector<128x128xf32>
      %17 = arith.mulf %16, %15 : vector<128x128xf32>
      %c0_13 = arith.constant 0 : index
      %c0_14 = arith.constant 0 : index
      %18 = vector.load %arg5[%c0_13, %c0_14] : memref<128x128xbf16, #tpu.memory_space<vmem>>, vector<128x128xbf16>
      %19 = arith.extf %18 : vector<128x128xbf16> to vector<128x128xf32>
      %20 = vector.broadcast %13 : f32 to vector<128x128xf32>
      %21 = arith.mulf %20, %19 : vector<128x128xf32>
      %22 = arith.addf %17, %21 : vector<128x128xf32>
      %23 = arith.truncf %22 : vector<128x128xf32> to vector<128x128xbf16>
      %c0_15 = arith.constant 0 : index
      %c0_16 = arith.constant 0 : index
      %24 = vector.load %arg6[%c0_15, %c0_16] : memref<128x128xbf16, #tpu.memory_space<vmem>>, vector<128x128xbf16>
      %cst_17 = arith.constant dense<0.000000e+00> : vector<128x128xf32>
      %25 = tpu.matmul %23, %24, %cst_17 {dimension_numbers = #tpu.dot_dimension_numbers<[1], [0], [0], [1], [0, 0, 1, 1], [], []>} : vector<128x128xbf16>, vector<128x128xbf16>, vector<128x128xf32> -> vector<128x128xf32>
      %26 = vector.broadcast %12 : f32 to vector<128x128xf32>
      %27 = arith.mulf %26, %25 : vector<128x128xf32>
      %cst_18 = arith.constant 1.000000e+00 : f32
      %28 = arith.subf %cst_18, %12 : f32
      %29 = vector.broadcast %28 : f32 to vector<128x128xf32>
      %30 = arith.mulf %29, %22 : vector<128x128xf32>
      %31 = arith.addf %27, %30 : vector<128x128xf32>
      %cst_19 = arith.constant 0.000000e+00 : f32
      %32 = vector.broadcast %cst_19 : f32 to vector<128x128xf32>
      %33 = arith.maximumf %31, %32 : vector<128x128xf32>
      %34 = arith.truncf %33 : vector<128x128xf32> to vector<128x128xbf16>
      %c0_20 = arith.constant 0 : index
      %c0_21 = arith.constant 0 : index
      %35 = vector.load %arg7[%c0_20, %c0_21] : memref<128x128xbf16, #tpu.memory_space<vmem>>, vector<128x128xbf16>
      tpu.vector_store %arg7[%c0_20, %c0_21], %34 {strides = array<i32>} : memref<128x128xbf16, #tpu.memory_space<vmem>>, vector<128x128xbf16>,
    } else {
    }
    return
  }
  func.func @transform_0(%arg0: i32, %arg1: i32, %arg2: memref<2xf32, #tpu.memory_space<smem>>) -> (i32, i32) {
    %c0_i32 = arith.constant 0 : i32
    return %arg0, %arg1 : i32, i32
  }
  func.func @transform_1(%arg0: i32, %arg1: i32, %arg2: memref<2xf32, #tpu.memory_space<smem>>) -> (i32, i32) {
    %c0_i32 = arith.constant 0 : i32
    %c0_i32_0 = arith.constant 0 : i32
    return %arg1, %c0_i32 : i32, i32
  }
  func.func @transform_2(%arg0: i32, %arg1: i32, %arg2: memref<2xf32, #tpu.memory_space<smem>>) -> (i32, i32) {
    %c0_i32 = arith.constant 0 : i32
    %c0_i32_0 = arith.constant 0 : i32
    return %arg0, %c0_i32 : i32, i32
  }
  func.func @transform_3(%arg0: i32, %arg1: i32, %arg2: memref<2xf32, #tpu.memory_space<smem>>) -> (i32, i32) {
    %c0_i32 = arith.constant 0 : i32
    %c0_i32_0 = arith.constant 0 : i32
    %c0_i32_1 = arith.constant 0 : i32
    return %c0_i32, %c0_i32_0 : i32, i32
  }
  func.func @transform_4(%arg0: i32, %arg1: i32, %arg2: memref<2xf32, #tpu.memory_space<smem>>) -> (i32, i32) {
    %c0_i32 = arith.constant 0 : i32
    %c0_i32_0 = arith.constant 0 : i32
    return %arg0, %c0_i32 : i32, i32
  }
}

module attributes {stable_mosaic.version = 11 : i64} {
  func.func @_linear_kernel(%arg0: i32, %arg1: memref<128x128xbf16, #tpu.memory_space<vmem>>, %arg2: memref<128x128xbf16, #tpu.memory_space<vmem>>, %arg3: memref<1x128xf32, #tpu.memory_space<vmem>>, %arg4: memref<128x128xbf16, #tpu.memory_space<vmem>>) attributes {dimension_semantics = [#tpu.dimension_semantics<parallel>], iteration_bounds = array<i64: 2>, scalar_prefetch = 0 : i64, scratch_operands = 0 : i64, tpu.core_type = #tpu.core_type<tc>, window_params = [{transform_indices = @transform_0, window_bounds = array<i64: 128, 128>}, {pipeline_mode = #tpu.pipeline_mode<synchronous>, transform_indices = @transform_1, window_bounds = array<i64: 128, 128>}, {pipeline_mode = #tpu.pipeline_mode<synchronous>, transform_indices = @transform_2, window_bounds = array<i64: 1, 128>}, {transform_indices = @transform_3, window_bounds = array<i64: 128, 128>}]} {
    %c0 = arith.constant 0 : index
    %c0_0 = arith.constant 0 : index
    %0 = vector.load %arg1[%c0, %c0_0] : memref<128x128xbf16, #tpu.memory_space<vmem>>, vector<128x128xbf16>
    %c0_1 = arith.constant 0 : index
    %c0_2 = arith.constant 0 : index
    %1 = vector.load %arg2[%c0_1, %c0_2] : memref<128x128xbf16, #tpu.memory_space<vmem>>, vector<128x128xbf16>
    %cst = arith.constant dense<0.000000e+00> : vector<128x128xf32>
    %2 = tpu.matmul %0, %1, %cst {dimension_numbers = #tpu.dot_dimension_numbers<[1], [0], [0], [1], [0, 0, 1, 1], [], []>} : vector<128x128xbf16>, vector<128x128xbf16>, vector<128x128xf32> -> vector<128x128xf32>
    %c0_3 = arith.constant 0 : index
    %c0_4 = arith.constant 0 : index
    %3 = vector.load %arg3[%c0_3, %c0_4] : memref<1x128xf32, #tpu.memory_space<vmem>>, vector<1x128xf32>
    %4 = vector.broadcast %3 : vector<1x128xf32> to vector<128x128xf32>
    %5 = arith.addf %2, %4 : vector<128x128xf32>
    %cst_5 = arith.constant 0.000000e+00 : f32
    %6 = vector.broadcast %cst_5 : f32 to vector<128x128xf32>
    %7 = arith.maximumf %5, %6 : vector<128x128xf32>
    %8 = arith.truncf %7 : vector<128x128xf32> to vector<128x128xbf16>
    %c0_6 = arith.constant 0 : index
    %c0_7 = arith.constant 0 : index
    %9 = vector.load %arg4[%c0_6, %c0_7] : memref<128x128xbf16, #tpu.memory_space<vmem>>, vector<128x128xbf16>
    tpu.vector_store %arg4[%c0_6, %c0_7], %8 {strides = array<i32>} : memref<128x128xbf16, #tpu.memory_space<vmem>>, vector<128x128xbf16>,
    return
  }
  func.func @transform_0(%arg0: i32) -> (i32, i32) {
    %c0_i32 = arith.constant 0 : i32
    %c0_i32_0 = arith.constant 0 : i32
    return %arg0, %c0_i32 : i32, i32
  }
  func.func @transform_1(%arg0: i32) -> (i32, i32) {
    %c0_i32 = arith.constant 0 : i32
    %c0_i32_0 = arith.constant 0 : i32
    %c0_i32_1 = arith.constant 0 : i32
    return %c0_i32, %c0_i32_0 : i32, i32
  }
  func.func @transform_2(%arg0: i32) -> (i32, i32) {
    %c0_i32 = arith.constant 0 : i32
    %c0_i32_0 = arith.constant 0 : i32
    %c0_i32_1 = arith.constant 0 : i32
    return %c0_i32, %c0_i32_0 : i32, i32
  }
  func.func @transform_3(%arg0: i32) -> (i32, i32) {
    %c0_i32 = arith.constant 0 : i32
    %c0_i32_0 = arith.constant 0 : i32
    return %arg0, %c0_i32 : i32, i32
  }
}

module attributes {stable_mosaic.version = 11 : i64} {
  func.func @_linear_kernel(%arg0: i32, %arg1: memref<128x128xbf16, #tpu.memory_space<vmem>>, %arg2: memref<128x128xbf16, #tpu.memory_space<vmem>>, %arg3: memref<1x128xf32, #tpu.memory_space<vmem>>, %arg4: memref<128x128xf32, #tpu.memory_space<vmem>>) attributes {dimension_semantics = [#tpu.dimension_semantics<parallel>], iteration_bounds = array<i64: 2>, scalar_prefetch = 0 : i64, scratch_operands = 0 : i64, tpu.core_type = #tpu.core_type<tc>, window_params = [{transform_indices = @transform_0, window_bounds = array<i64: 128, 128>}, {pipeline_mode = #tpu.pipeline_mode<synchronous>, transform_indices = @transform_1, window_bounds = array<i64: 128, 128>}, {pipeline_mode = #tpu.pipeline_mode<synchronous>, transform_indices = @transform_2, window_bounds = array<i64: 1, 128>}, {transform_indices = @transform_3, window_bounds = array<i64: 128, 128>}]} {
    %c0 = arith.constant 0 : index
    %c0_0 = arith.constant 0 : index
    %0 = vector.load %arg1[%c0, %c0_0] : memref<128x128xbf16, #tpu.memory_space<vmem>>, vector<128x128xbf16>
    %c0_1 = arith.constant 0 : index
    %c0_2 = arith.constant 0 : index
    %1 = vector.load %arg2[%c0_1, %c0_2] : memref<128x128xbf16, #tpu.memory_space<vmem>>, vector<128x128xbf16>
    %cst = arith.constant dense<0.000000e+00> : vector<128x128xf32>
    %2 = tpu.matmul %0, %1, %cst {dimension_numbers = #tpu.dot_dimension_numbers<[1], [0], [0], [1], [0, 0, 1, 1], [], []>} : vector<128x128xbf16>, vector<128x128xbf16>, vector<128x128xf32> -> vector<128x128xf32>
    %c0_3 = arith.constant 0 : index
    %c0_4 = arith.constant 0 : index
    %3 = vector.load %arg3[%c0_3, %c0_4] : memref<1x128xf32, #tpu.memory_space<vmem>>, vector<1x128xf32>
    %4 = vector.broadcast %3 : vector<1x128xf32> to vector<128x128xf32>
    %5 = arith.addf %2, %4 : vector<128x128xf32>
    %c0_5 = arith.constant 0 : index
    %c0_6 = arith.constant 0 : index
    %6 = vector.load %arg4[%c0_5, %c0_6] : memref<128x128xf32, #tpu.memory_space<vmem>>, vector<128x128xf32>
    tpu.vector_store %arg4[%c0_5, %c0_6], %5 {strides = array<i32>} : memref<128x128xf32, #tpu.memory_space<vmem>>, vector<128x128xf32>,
    return
  }
  func.func @transform_0(%arg0: i32) -> (i32, i32) {
    %c0_i32 = arith.constant 0 : i32
    %c0_i32_0 = arith.constant 0 : i32
    return %arg0, %c0_i32 : i32, i32
  }
  func.func @transform_1(%arg0: i32) -> (i32, i32) {
    %c0_i32 = arith.constant 0 : i32
    %c0_i32_0 = arith.constant 0 : i32
    %c0_i32_1 = arith.constant 0 : i32
    return %c0_i32, %c0_i32_0 : i32, i32
  }
  func.func @transform_2(%arg0: i32) -> (i32, i32) {
    %c0_i32 = arith.constant 0 : i32
    %c0_i32_0 = arith.constant 0 : i32
    %c0_i32_1 = arith.constant 0 : i32
    return %c0_i32, %c0_i32_0 : i32, i32
  }
  func.func @transform_3(%arg0: i32) -> (i32, i32) {
    %c0_i32 = arith.constant 0 : i32
    %c0_i32_0 = arith.constant 0 : i32
    return %arg0, %c0_i32 : i32, i32
  }
}

</mosaic_0001>

<llo_original>
// kernel: gcnii_forward.7
$region0: #{gcnii_forward.7}
  #allocation0 [shape = 'u32[]', space=smem, size = 0x4, offset = 0x4, fixed_abs, tag = 'smem constant byte address 0x4 - core index']
  #allocation1 [shape = 'u32[144,128]{1,0:T(1,128)}', space=vmem, size = 0x12000, scoped, tag = 'internal scratch']
  %s0 = inlined_call_operand.vmem [shape: bf16[256,128], index: 0, kind: input, shape index: {}]
  %s1 = inlined_call_operand.vmem [shape: bf16[128,128], index: 1, kind: input, shape index: {}]
  %s2 = inlined_call_operand.vmem [shape: f32[1,128], index: 2, kind: input, shape index: {}]
  %s3 = inlined_call_operand.vmem [shape: f32[256,128], index: 3, kind: output, shape index: {}]
  %s4 = sld [smem:[#allocation0]]
  $region45: #{gcnii_forward.7} parent=0
    _
  %s6 = ssub.s32 1, %s4
  %s7 = scalar_select 0, %s6, %s4
  loop: start=0, step=1, limit=4
  $region2: #{gcnii_forward.7} parent=0 // loop_pre_header
    _
  $region3: #{gcnii_forward.7} parent=0 // loop_header
    %s9 = sphi 0, %s13
    %p10 = scmp.ge.s32.totalorder %s9, 4
    %s19 = sphi 0, %s21
    %s22 = sphi 0, %s19
    %s23 = sphi 0, %s22
    %s39 = sphi 0, %s23
    %s43 = sphi 0, %s43
    %s45 = sphi 0, %s43
    %s46 = sphi 0, %s45
    %s60 = sphi 0, %s46
    %s64 = sphi 0, %s64
    %s66 = sphi 0, %s64
    %s67 = sphi 0, %s66
    %s81 = sphi 0, %s67
    %s87 = sphi 0, %s89
    %s90 = sphi 0, %s87
    %s91 = sphi 0, %s90
    %s107 = sphi 0, %s91
  $region4: #{gcnii_forward.7} parent=0 // loop_header_branch
    %12 = sbr.rel (%p10) target = $region8
  $region5: #{gcnii_forward.7} parent=0 // loop_body
    %s14 = ssub.s32 %s9, 1
    %s15 = ssub.s32 %s9, 2
    %s16 = sadd.s32 %s9, 1
    %s17 = ssub.s32 %s9, %s16
    %p18 = scmp.eq.s32.totalorder %s17, 0
    %s20 = sadd.s32 %s19, 1
    %s21 = scalar_select %p18, %s19, %s20
    %p24 = pneg %p18
    %p25 = scmp.eq.s32.totalorder %s9, 1
    %p26 = por %p24, %p25
    %p27 = scmp.ne.s32.totalorder %s19, %s22
    %p28 = scmp.eq.s32.totalorder %s9, 0
    %p29 = por %p27, %p28
    %p30 = scmp.ne.s32.totalorder %s19, %s22
    %p31 = scmp.eq.s32.totalorder %s14, 1
    %p32 = por %p30, %p31
    %p33 = scmp.ne.s32.totalorder %s22, %s23
    %p34 = scmp.eq.s32.totalorder %s14, 0
    %p35 = por %p33, %p34
    %p36 = scmp.ne.s32.totalorder %s22, %s23
    %p37 = scmp.eq.s32.totalorder %s15, 1
    %p38 = por %p36, %p37
    %p40 = scmp.ne.s32.totalorder %s23, %s39
    %p41 = scmp.eq.s32.totalorder %s15, 0
    %p42 = por %p40, %p41
    %s44 = sadd.s32 %s43, 1
    %p47 = scmp.eq.s32.totalorder %s9, 1
    %p48 = scmp.ne.s32.totalorder %s43, %s45
    %p49 = scmp.eq.s32.totalorder %s9, 0
    %p50 = por %p48, %p49
    %p51 = scmp.ne.s32.totalorder %s43, %s45
    %p52 = scmp.eq.s32.totalorder %s14, 1
    %p53 = por %p51, %p52
    %p54 = scmp.ne.s32.totalorder %s45, %s46
    %p55 = scmp.eq.s32.totalorder %s14, 0
    %p56 = por %p54, %p55
    %p57 = scmp.ne.s32.totalorder %s45, %s46
    %p58 = scmp.eq.s32.totalorder %s15, 1
    %p59 = por %p57, %p58
    %p61 = scmp.ne.s32.totalorder %s46, %s60
    %p62 = scmp.eq.s32.totalorder %s15, 0
    %p63 = por %p61, %p62
    %s65 = sadd.s32 %s64, 1
    %p68 = scmp.eq.s32.totalorder %s9, 1
    %p69 = scmp.ne.s32.totalorder %s64, %s66
    %p70 = scmp.eq.s32.totalorder %s9, 0
    %p71 = por %p69, %p70
    %p72 = scmp.ne.s32.totalorder %s64, %s66
    %p73 = scmp.eq.s32.totalorder %s14, 1
    %p74 = por %p72, %p73
    %p75 = scmp.ne.s32.totalorder %s66, %s67
    %p76 = scmp.eq.s32.totalorder %s14, 0
    %p77 = por %p75, %p76
    %p78 = scmp.ne.s32.totalorder %s66, %s67
    %p79 = scmp.eq.s32.totalorder %s15, 1
    %p80 = por %p78, %p79
    %p82 = scmp.ne.s32.totalorder %s67, %s81
    %p83 = scmp.eq.s32.totalorder %s15, 0
    %p84 = por %p82, %p83
    %s85 = ssub.s32 %s9, %s16
    %p86 = scmp.eq.s32.totalorder %s85, 0
    %s88 = sadd.s32 %s87, 1
    %s89 = scalar_select %p86, %s87, %s88
    %p92 = pneg %p86
    %p93 = scmp.eq.s32.totalorder %s9, 1
    %p94 = por %p92, %p93
    %p95 = scmp.ne.s32.totalorder %s87, %s90
    %p96 = scmp.eq.s32.totalorder %s9, 0
    %p97 = por %p95, %p96
    %p98 = scmp.ne.s32.totalorder %s87, %s90
    %p99 = scmp.eq.s32.totalorder %s14, 1
    %p100 = por %p98, %p99
    %p101 = scmp.ne.s32.totalorder %s90, %s91
    %p102 = scmp.eq.s32.totalorder %s14, 0
    %p103 = por %p101, %p102
    %p104 = scmp.ne.s32.totalorder %s90, %s91
    %p105 = scmp.eq.s32.totalorder %s15, 1
    %p106 = por %p104, %p105
    %p108 = scmp.ne.s32.totalorder %s91, %s107
    %p109 = scmp.eq.s32.totalorder %s15, 0
    %p110 = por %p108, %p109
    %p111 = scmp.le.s32.totalorder 1, %s9
    %p112 = scmp.lt.s32.totalorder %s9, 3
    %p113 = pnand %p111, %p112
    %p114 = pneg %p113
    // Predicated region
    $region9: #{gcnii_forward.7} parent=5 // pred_check
      _
    $region10: #{gcnii_forward.7} parent=5 // pred_check_branch
      %116 = sbr.rel (%p113) target = $region12
    $region11: #{gcnii_forward.7} parent=5 // pred_region
      %s117 = ssub.s32 %s9, 1
      // Predicated region
      $region13: #{gcnii_forward.7} parent=11 // pred_check
        %p118 = pneg %p56
      $region14: #{gcnii_forward.7} parent=11 // pred_check_branch
        %120 = sbr.rel (%p118) target = $region16
      $region15: #{gcnii_forward.7} parent=11 // pred_region
        _
      $region16: #{gcnii_forward.7} parent=11 // pred_fallthru
        _
      // Predicated region
      $region17: #{gcnii_forward.7} parent=11 // pred_check
        %p121 = pneg %p77
      $region18: #{gcnii_forward.7} parent=11 // pred_check_branch
        %123 = sbr.rel (%p121) target = $region20
      $region19: #{gcnii_forward.7} parent=11 // pred_region
        _
      $region20: #{gcnii_forward.7} parent=11 // pred_fallthru
        _
    $region12: #{gcnii_forward.7} parent=5 // pred_fallthru
      _
    %p124 = scmp.lt.s32.totalorder %s9, 2
    // Predicated region
    $region21: #{gcnii_forward.7} parent=5 // pred_check
      %p125 = pneg %p124
    $region22: #{gcnii_forward.7} parent=5 // pred_check_branch
      %127 = sbr.rel (%p125) target = $region24
    $region23: #{gcnii_forward.7} parent=5 // pred_region
      // Predicated region
      $region25: #{gcnii_forward.7} parent=23 // pred_check
        %p128 = pneg %p29
      $region26: #{gcnii_forward.7} parent=23 // pred_check_branch
        %130 = sbr.rel (%p128) target = $region28
      $region27: #{gcnii_forward.7} parent=23 // pred_region
        %s131 = smul.u32 16, %s9
        %p132 = scmp.lt.s32.totalorder %s131, 31
        %s133 = scalar_select %p132, %s131, 31
        %s134 = smul.addr %s133, 4
        %s135 = scalar_lea.vmem %s0, %s134
        %s136 = smul.u32 16, %s9
      $region28: #{gcnii_forward.7} parent=23 // pred_fallthru
        _
    $region24: #{gcnii_forward.7} parent=5 // pred_fallthru
      _
    %p137 = scmp.le.s32.totalorder 1, %s9
    %p138 = scmp.lt.s32.totalorder %s9, 3
    %p139 = pnand %p137, %p138
    %p140 = pneg %p139
    // Predicated region
    $region29: #{gcnii_forward.7} parent=5 // pred_check
      _
    $region30: #{gcnii_forward.7} parent=5 // pred_check_branch
      %142 = sbr.rel (%p139) target = $region32
    $region31: #{gcnii_forward.7} parent=5 // pred_region
      %s143 = ssub.s32 %s9, 1
      %s144 = smul.u32 16, %s14
      %p145 = scmp.lt.s32.totalorder %s144, 31
      %s146 = scalar_select %p145, %s144, 31
      %s147 = smul.addr %s146, 4
      %s148 = scalar_lea.vmem %s0, %s147
      %p149 = pneg %p35
      %p150 = pneg %p32
      %p151 = pneg %p56
      %p152 = pneg %p53
      %p153 = pneg %p77
      %p154 = pneg %p74
      %p155 = pneg %p103
      %p156 = pneg %p100
      %s157 = smul.u32 16, %s14
      %p158 = scmp.lt.s32.totalorder %s157, 31
      %s159 = scalar_select %p158, %s157, 31
      %s160 = smul.addr %s159, 8
      %s161 = scalar_lea.vmem %s3, %s160
      %s162 = smul.u32 16, %s14
      %p163 = scmp.lt.s32.totalorder %s162, 31
      %s164 = scalar_select %p163, %s162, 31
      %s165 = smul.addr %s164, 4
      %s166 = scalar_lea.vmem %s0, %s165
      %s167 = smul.u32 16, %s14
      %s168 = smul.u32 16, %s14
      %p169 = scmp.lt.s32.totalorder %s168, 31
      %s170 = scalar_select %p169, %s168, 31
      %s171 = smul.addr %s170, 8
      %s172 = scalar_lea.vmem %s3, %s171
      %s173 = smul.u32 16, %s14
      %v175 = vld [vmem:[%s166] sm:$0xf]
      %v176 = vld [vmem:[%s166 + $0x4] sm:$0xf]
      %v177 = vld [vmem:[%s166 + $0x8] sm:$0xf]
      %v178 = vld [vmem:[%s166 + $0xc] sm:$0xf]
      %v179 = vld [vmem:[%s166 + $0x10] sm:$0xf]
      %v180 = vld [vmem:[%s166 + $0x14] sm:$0xf]
      %v181 = vld [vmem:[%s166 + $0x18] sm:$0xf]
      %v182 = vld [vmem:[%s166 + $0x1c] sm:$0xf]
      %v183 = vld [vmem:[%s166 + $0x20] sm:$0xf]
      %v184 = vld [vmem:[%s166 + $0x24] sm:$0xf]
      %v185 = vld [vmem:[%s166 + $0x28] sm:$0xf]
      %v186 = vld [vmem:[%s166 + $0x2c] sm:$0xf]
      %v187 = vld [vmem:[%s166 + $0x30] sm:$0xf]
      %v188 = vld [vmem:[%s166 + $0x34] sm:$0xf]
      %v189 = vld [vmem:[%s166 + $0x38] sm:$0xf]
      %v190 = vld [vmem:[%s166 + $0x3c] sm:$0xf]
      %v191 = vld [vmem:[%s1] sm:$0xf]
      %v192 = vld [vmem:[%s1 + $0x4] sm:$0xf]
      %v193 = vld [vmem:[%s1 + $0x8] sm:$0xf]
      %v194 = vld [vmem:[%s1 + $0xc] sm:$0xf]
      %v195 = vld [vmem:[%s1 + $0x10] sm:$0xf]
      %v196 = vld [vmem:[%s1 + $0x14] sm:$0xf]
      %v197 = vld [vmem:[%s1 + $0x18] sm:$0xf]
      %v198 = vld [vmem:[%s1 + $0x1c] sm:$0xf]
      %v199 = vld [vmem:[%s1 + $0x20] sm:$0xf]
      %v200 = vld [vmem:[%s1 + $0x24] sm:$0xf]
      %v201 = vld [vmem:[%s1 + $0x28] sm:$0xf]
      %v202 = vld [vmem:[%s1 + $0x2c] sm:$0xf]
      %v203 = vld [vmem:[%s1 + $0x30] sm:$0xf]
      %v204 = vld [vmem:[%s1 + $0x34] sm:$0xf]
      %v205 = vld [vmem:[%s1 + $0x38] sm:$0xf]
      %v206 = vld [vmem:[%s1 + $0x3c] sm:$0xf]
      %v207 = vld [vmem:[%s2] sm:$0x1]
      %v209 = vlaneseq
      %v210 = vshrl.u32 %v209, 7
      %v211 = vsub.s32 0, %v210
      %v212 = vrot.slane %v207, %v211
      %v230 = vunpack.c.l.b16 %v175
      %v231 = vunpack.c.l.b16 %v176
      %v232 = vunpack.c.l.b16 %v177
      %v233 = vunpack.c.l.b16 %v178
      %v234 = vunpack.c.l.b16 %v179
      %v235 = vunpack.c.l.b16 %v180
      %v236 = vunpack.c.l.b16 %v181
      %v237 = vunpack.c.l.b16 %v182
      %v238 = vunpack.c.l.b16 %v183
      %v239 = vunpack.c.l.b16 %v184
      %v240 = vunpack.c.l.b16 %v185
      %v241 = vunpack.c.l.b16 %v186
      %v242 = vunpack.c.l.b16 %v187
      %v243 = vunpack.c.l.b16 %v188
      %v244 = vunpack.c.l.b16 %v189
      %v245 = vunpack.c.l.b16 %v190
      %v246 = vpack.c.b16 %v231, %v230
      %v247 = vpack.c.b16 %v233, %v232
      %v248 = vpack.c.b16 %v235, %v234
      %v249 = vpack.c.b16 %v237, %v236
      %v250 = vpack.c.b16 %v239, %v238
      %v251 = vpack.c.b16 %v241, %v240
      %v252 = vpack.c.b16 %v243, %v242
      %v253 = vpack.c.b16 %v245, %v244
      %v278 = vunpack.c.l.b16 %v191
      %v279 = vunpack.c.l.b16 %v192
      %v280 = vunpack.c.l.b16 %v193
      %v281 = vunpack.c.l.b16 %v194
      %v282 = vunpack.c.l.b16 %v195
      %v283 = vunpack.c.l.b16 %v196
      %v284 = vunpack.c.l.b16 %v197
      %v285 = vunpack.c.l.b16 %v198
      %v286 = vunpack.c.l.b16 %v199
      %v287 = vunpack.c.l.b16 %v200
      %v288 = vunpack.c.l.b16 %v201
      %v289 = vunpack.c.l.b16 %v202
      %v290 = vunpack.c.l.b16 %v203
      %v291 = vunpack.c.l.b16 %v204
      %v292 = vunpack.c.l.b16 %v205
      %v293 = vunpack.c.l.b16 %v206
      %v294 = vpack.c.b16 %v279, %v278
      %v295 = vpack.c.b16 %v281, %v280
      %v296 = vpack.c.b16 %v283, %v282
      %v297 = vpack.c.b16 %v285, %v284
      %v298 = vpack.c.b16 %v287, %v286
      %v299 = vpack.c.b16 %v289, %v288
      %v300 = vpack.c.b16 %v291, %v290
      %v301 = vpack.c.b16 %v293, %v292
      %310 = vmatprep.subr.bf16.mxu0 0
      %311 = vmatpush1.bf16.msra.mxu0 %v294
      %312 = vmatprep.subr.bf16.mxu0 0
      %313 = vmatpush1.bf16.msra.mxu0 %v295
      %314 = vmatprep.subr.bf16.mxu0 0
      %315 = vmatpush1.bf16.msra.mxu0 %v296
      %316 = vmatprep.subr.bf16.mxu0 0
      %317 = vmatpush1.bf16.msra.mxu0 %v297
      %318 = vmatprep.subr.bf16.mxu0 0
      %319 = vmatpush1.bf16.msra.mxu0 %v298
      %320 = vmatprep.subr.bf16.mxu0 0
      %321 = vmatpush1.bf16.msra.mxu0 %v299
      %322 = vmatprep.subr.bf16.mxu0 0
      %323 = vmatpush1.bf16.msra.mxu0 %v300
      %324 = vmatprep.subr.bf16.mxu0 0
      %325 = vmatpush1.bf16.msra.mxu0 %v301
      %326 = vmatprep.subr.bf16.mxu0 0
      %327 = vmatpush1.bf16.msra.mxu0 0
      %328 = vmatprep.subr.bf16.mxu0 0
      %329 = vmatpush1.bf16.msra.mxu0 0
      %330 = vmatprep.subr.bf16.mxu0 0
      %331 = vmatpush1.bf16.msra.mxu0 0
      %332 = vmatprep.subr.bf16.mxu0 0
      %333 = vmatpush1.bf16.msra.mxu0 0
      %334 = vmatprep.subr.bf16.mxu0 0
      %335 = vmatpush1.bf16.msra.mxu0 0
      %336 = vmatprep.subr.bf16.mxu0 0
      %337 = vmatpush1.bf16.msra.mxu0 0
      %338 = vmatprep.subr.bf16.mxu0 0
      %339 = vmatpush1.bf16.msra.mxu0 0
      %340 = vmatprep.subr.bf16.mxu0 0
      %341 = vmatpush1.bf16.msra.mxu0 0
      %342 = vmatprep.mubr.bf16.mxu0 0
      %343 = vmatmul.mubr.bf16.gmra.mrb[0].mxu0 %v246
      %v344 = vpop.f32.mrb[0].mxu0
      %v345 = vadd.f32 %v212, %v344
      %v346 = vpop.f32.mrb[0].mxu0
      %v347 = vpop.f32.mrb[0].mxu0
      %v348 = vadd.f32 %v212, %v347
      %v349 = vpop.f32.mrb[0].mxu0
      %350 = vmatprep.mubr.bf16.mxu0 0
      %351 = vmatmul.mubr.bf16.gmra.mrb[0].mxu0 %v247
      %v352 = vpop.f32.mrb[0].mxu0
      %v353 = vadd.f32 %v212, %v352
      %v354 = vpop.f32.mrb[0].mxu0
      %v355 = vpop.f32.mrb[0].mxu0
      %v356 = vadd.f32 %v212, %v355
      %v357 = vpop.f32.mrb[0].mxu0
      %358 = vmatprep.mubr.bf16.mxu0 0
      %359 = vmatmul.mubr.bf16.gmra.mrb[0].mxu0 %v248
      %v360 = vpop.f32.mrb[0].mxu0
      %v361 = vadd.f32 %v212, %v360
      %v362 = vpop.f32.mrb[0].mxu0
      %v363 = vpop.f32.mrb[0].mxu0
      %v364 = vadd.f32 %v212, %v363
      %v365 = vpop.f32.mrb[0].mxu0
      %366 = vmatprep.mubr.bf16.mxu0 0
      %367 = vmatmul.mubr.bf16.gmra.mrb[0].mxu0 %v249
      %v368 = vpop.f32.mrb[0].mxu0
      %v369 = vadd.f32 %v212, %v368
      %v370 = vpop.f32.mrb[0].mxu0
      %v371 = vpop.f32.mrb[0].mxu0
      %v372 = vadd.f32 %v212, %v371
      %v373 = vpop.f32.mrb[0].mxu0
      %374 = vmatprep.mubr.bf16.mxu0 0
      %375 = vmatmul.mubr.bf16.gmra.mrb[0].mxu0 %v250
      %v376 = vpop.f32.mrb[0].mxu0
      %v377 = vadd.f32 %v212, %v376
      %v378 = vpop.f32.mrb[0].mxu0
      %v379 = vpop.f32.mrb[0].mxu0
      %v380 = vadd.f32 %v212, %v379
      %v381 = vpop.f32.mrb[0].mxu0
      %382 = vmatprep.mubr.bf16.mxu0 0
      %383 = vmatmul.mubr.bf16.gmra.mrb[0].mxu0 %v251
      %v384 = vpop.f32.mrb[0].mxu0
      %v385 = vadd.f32 %v212, %v384
      %v386 = vpop.f32.mrb[0].mxu0
      %v387 = vpop.f32.mrb[0].mxu0
      %v388 = vadd.f32 %v212, %v387
      %v389 = vpop.f32.mrb[0].mxu0
      %390 = vmatprep.mubr.bf16.mxu0 0
      %391 = vmatmul.mubr.bf16.gmra.mrb[0].mxu0 %v252
      %v392 = vpop.f32.mrb[0].mxu0
      %v393 = vadd.f32 %v212, %v392
      %v394 = vpop.f32.mrb[0].mxu0
      %v395 = vpop.f32.mrb[0].mxu0
      %v396 = vadd.f32 %v212, %v395
      %v397 = vpop.f32.mrb[0].mxu0
      %398 = vmatprep.mubr.bf16.mxu0 0
      %399 = vmatmul.mubr.bf16.gmra.mrb[0].mxu0 %v253
      %v400 = vpop.f32.mrb[0].mxu0
      %v401 = vadd.f32 %v212, %v400
      %v402 = vpop.f32.mrb[0].mxu0
      %v403 = vpop.f32.mrb[0].mxu0
      %v404 = vadd.f32 %v212, %v403
      %v405 = vpop.f32.mrb[0].mxu0
      %406 = vdwg.mxu0
      %407 = vst [vmem:[%s172] sm:$0xff] %v345
      %408 = vst [vmem:[%s172 + $0x8] sm:$0xff] %v348
      %409 = vst [vmem:[%s172 + $0x10] sm:$0xff] %v353
      %410 = vst [vmem:[%s172 + $0x18] sm:$0xff] %v356
      %411 = vst [vmem:[%s172 + $0x20] sm:$0xff] %v361
      %412 = vst [vmem:[%s172 + $0x28] sm:$0xff] %v364
      %413 = vst [vmem:[%s172 + $0x30] sm:$0xff] %v369
      %414 = vst [vmem:[%s172 + $0x38] sm:$0xff] %v372
      %415 = vst [vmem:[%s172 + $0x40] sm:$0xff] %v377
      %416 = vst [vmem:[%s172 + $0x48] sm:$0xff] %v380
      %417 = vst [vmem:[%s172 + $0x50] sm:$0xff] %v385
      %418 = vst [vmem:[%s172 + $0x58] sm:$0xff] %v388
      %419 = vst [vmem:[%s172 + $0x60] sm:$0xff] %v393
      %420 = vst [vmem:[%s172 + $0x68] sm:$0xff] %v396
      %421 = vst [vmem:[%s172 + $0x70] sm:$0xff] %v401
      %422 = vst [vmem:[%s172 + $0x78] sm:$0xff] %v404
      %s423 = smul.u32 16, %s14
      %p424 = scmp.lt.s32.totalorder %s423, 31
      %s425 = scalar_select %p424, %s423, 31
      %s426 = smul.addr %s425, 8
      %s427 = scalar_lea.vmem %s3, %s426
      // Predicated region
      $region33: #{gcnii_forward.7} parent=31 // pred_check
        %p428 = pneg %p100
      $region34: #{gcnii_forward.7} parent=31 // pred_check_branch
        %430 = sbr.rel (%p428) target = $region36
      $region35: #{gcnii_forward.7} parent=31 // pred_region
        %s431 = smul.u32 16, %s14
      $region36: #{gcnii_forward.7} parent=31 // pred_fallthru
        _
    $region32: #{gcnii_forward.7} parent=5 // pred_fallthru
      _
    %p432 = scmp.le.s32.totalorder 2, %s9
    // Predicated region
    $region37: #{gcnii_forward.7} parent=5 // pred_check
      %p433 = pneg %p432
    $region38: #{gcnii_forward.7} parent=5 // pred_check_branch
      %435 = sbr.rel (%p433) target = $region40
    $region39: #{gcnii_forward.7} parent=5 // pred_region
      %s436 = ssub.s32 %s9, 2
      // Predicated region
      $region41: #{gcnii_forward.7} parent=39 // pred_check
        %p437 = pneg %p106
      $region42: #{gcnii_forward.7} parent=39 // pred_check_branch
        %439 = sbr.rel (%p437) target = $region44
      $region43: #{gcnii_forward.7} parent=39 // pred_region
        %s440 = smul.u32 16, %s15
        %p441 = scmp.lt.s32.totalorder %s440, 31
        %s442 = scalar_select %p441, %s440, 31
        %s443 = smul.addr %s442, 8
        %s444 = scalar_lea.vmem %s3, %s443
      $region44: #{gcnii_forward.7} parent=39 // pred_fallthru
        _
    $region40: #{gcnii_forward.7} parent=5 // pred_fallthru
      _
  $region6: #{gcnii_forward.7} parent=0 // loop_footer
    %s13 = sadd.s32 1, %s9
  $region7: #{gcnii_forward.7} parent=0 // loop_footer_branch
    %8 = sbr.rel target = $region3
  $region8: #{gcnii_forward.7} parent=0 // loop_exit
    _

// kernel: gcnii_forward.4
$region0: #{gcnii_forward.4}
  #allocation0 [shape = 'u32[]', space=smem, size = 0x4, offset = 0x4, fixed_abs, tag = 'smem constant byte address 0x4 - core index']
  #allocation1 [shape = 'u32[144,128]{1,0:T(1,128)}', space=vmem, size = 0x12000, scoped, tag = 'internal scratch']
  %s0 = inlined_call_operand.vmem [shape: bf16[256,128], index: 0, kind: input, shape index: {}]
  %s1 = inlined_call_operand.vmem [shape: bf16[128,128], index: 1, kind: input, shape index: {}]
  %s2 = inlined_call_operand.vmem [shape: f32[1,128], index: 2, kind: input, shape index: {}]
  %s3 = inlined_call_operand.vmem [shape: bf16[256,128], index: 3, kind: output, shape index: {}]
  %s4 = sld [smem:[#allocation0]]
  $region45: #{gcnii_forward.4} parent=0
    _
  %s6 = ssub.s32 1, %s4
  %s7 = scalar_select 0, %s6, %s4
  loop: start=0, step=1, limit=4
  $region2: #{gcnii_forward.4} parent=0 // loop_pre_header
    _
  $region3: #{gcnii_forward.4} parent=0 // loop_header
    %s9 = sphi 0, %s13
    %p10 = scmp.ge.s32.totalorder %s9, 4
    %s19 = sphi 0, %s21
    %s22 = sphi 0, %s19
    %s23 = sphi 0, %s22
    %s39 = sphi 0, %s23
    %s43 = sphi 0, %s43
    %s45 = sphi 0, %s43
    %s46 = sphi 0, %s45
    %s60 = sphi 0, %s46
    %s64 = sphi 0, %s64
    %s66 = sphi 0, %s64
    %s67 = sphi 0, %s66
    %s81 = sphi 0, %s67
    %s87 = sphi 0, %s89
    %s90 = sphi 0, %s87
    %s91 = sphi 0, %s90
    %s107 = sphi 0, %s91
  $region4: #{gcnii_forward.4} parent=0 // loop_header_branch
    %12 = sbr.rel (%p10) target = $region8
  $region5: #{gcnii_forward.4} parent=0 // loop_body
    %s14 = ssub.s32 %s9, 1
    %s15 = ssub.s32 %s9, 2
    %s16 = sadd.s32 %s9, 1
    %s17 = ssub.s32 %s9, %s16
    %p18 = scmp.eq.s32.totalorder %s17, 0
    %s20 = sadd.s32 %s19, 1
    %s21 = scalar_select %p18, %s19, %s20
    %p24 = pneg %p18
    %p25 = scmp.eq.s32.totalorder %s9, 1
    %p26 = por %p24, %p25
    %p27 = scmp.ne.s32.totalorder %s19, %s22
    %p28 = scmp.eq.s32.totalorder %s9, 0
    %p29 = por %p27, %p28
    %p30 = scmp.ne.s32.totalorder %s19, %s22
    %p31 = scmp.eq.s32.totalorder %s14, 1
    %p32 = por %p30, %p31
    %p33 = scmp.ne.s32.totalorder %s22, %s23
    %p34 = scmp.eq.s32.totalorder %s14, 0
    %p35 = por %p33, %p34
    %p36 = scmp.ne.s32.totalorder %s22, %s23
    %p37 = scmp.eq.s32.totalorder %s15, 1
    %p38 = por %p36, %p37
    %p40 = scmp.ne.s32.totalorder %s23, %s39
    %p41 = scmp.eq.s32.totalorder %s15, 0
    %p42 = por %p40, %p41
    %s44 = sadd.s32 %s43, 1
    %p47 = scmp.eq.s32.totalorder %s9, 1
    %p48 = scmp.ne.s32.totalorder %s43, %s45
    %p49 = scmp.eq.s32.totalorder %s9, 0
    %p50 = por %p48, %p49
    %p51 = scmp.ne.s32.totalorder %s43, %s45
    %p52 = scmp.eq.s32.totalorder %s14, 1
    %p53 = por %p51, %p52
    %p54 = scmp.ne.s32.totalorder %s45, %s46
    %p55 = scmp.eq.s32.totalorder %s14, 0
    %p56 = por %p54, %p55
    %p57 = scmp.ne.s32.totalorder %s45, %s46
    %p58 = scmp.eq.s32.totalorder %s15, 1
    %p59 = por %p57, %p58
    %p61 = scmp.ne.s32.totalorder %s46, %s60
    %p62 = scmp.eq.s32.totalorder %s15, 0
    %p63 = por %p61, %p62
    %s65 = sadd.s32 %s64, 1
    %p68 = scmp.eq.s32.totalorder %s9, 1
    %p69 = scmp.ne.s32.totalorder %s64, %s66
    %p70 = scmp.eq.s32.totalorder %s9, 0
    %p71 = por %p69, %p70
    %p72 = scmp.ne.s32.totalorder %s64, %s66
    %p73 = scmp.eq.s32.totalorder %s14, 1
    %p74 = por %p72, %p73
    %p75 = scmp.ne.s32.totalorder %s66, %s67
    %p76 = scmp.eq.s32.totalorder %s14, 0
    %p77 = por %p75, %p76
    %p78 = scmp.ne.s32.totalorder %s66, %s67
    %p79 = scmp.eq.s32.totalorder %s15, 1
    %p80 = por %p78, %p79
    %p82 = scmp.ne.s32.totalorder %s67, %s81
    %p83 = scmp.eq.s32.totalorder %s15, 0
    %p84 = por %p82, %p83
    %s85 = ssub.s32 %s9, %s16
    %p86 = scmp.eq.s32.totalorder %s85, 0
    %s88 = sadd.s32 %s87, 1
    %s89 = scalar_select %p86, %s87, %s88
    %p92 = pneg %p86
    %p93 = scmp.eq.s32.totalorder %s9, 1
    %p94 = por %p92, %p93
    %p95 = scmp.ne.s32.totalorder %s87, %s90
    %p96 = scmp.eq.s32.totalorder %s9, 0
    %p97 = por %p95, %p96
    %p98 = scmp.ne.s32.totalorder %s87, %s90
    %p99 = scmp.eq.s32.totalorder %s14, 1
    %p100 = por %p98, %p99
    %p101 = scmp.ne.s32.totalorder %s90, %s91
    %p102 = scmp.eq.s32.totalorder %s14, 0
    %p103 = por %p101, %p102
    %p104 = scmp.ne.s32.totalorder %s90, %s91
    %p105 = scmp.eq.s32.totalorder %s15, 1
    %p106 = por %p104, %p105
    %p108 = scmp.ne.s32.totalorder %s91, %s107
    %p109 = scmp.eq.s32.totalorder %s15, 0
    %p110 = por %p108, %p109
    %p111 = scmp.le.s32.totalorder 1, %s9
    %p112 = scmp.lt.s32.totalorder %s9, 3
    %p113 = pnand %p111, %p112
    %p114 = pneg %p113
    // Predicated region
    $region9: #{gcnii_forward.4} parent=5 // pred_check
      _
    $region10: #{gcnii_forward.4} parent=5 // pred_check_branch
      %116 = sbr.rel (%p113) target = $region12
    $region11: #{gcnii_forward.4} parent=5 // pred_region
      %s117 = ssub.s32 %s9, 1
      // Predicated region
      $region13: #{gcnii_forward.4} parent=11 // pred_check
        %p118 = pneg %p56
      $region14: #{gcnii_forward.4} parent=11 // pred_check_branch
        %120 = sbr.rel (%p118) target = $region16
      $region15: #{gcnii_forward.4} parent=11 // pred_region
        _
      $region16: #{gcnii_forward.4} parent=11 // pred_fallthru
        _
      // Predicated region
      $region17: #{gcnii_forward.4} parent=11 // pred_check
        %p121 = pneg %p77
      $region18: #{gcnii_forward.4} parent=11 // pred_check_branch
        %123 = sbr.rel (%p121) target = $region20
      $region19: #{gcnii_forward.4} parent=11 // pred_region
        _
      $region20: #{gcnii_forward.4} parent=11 // pred_fallthru
        _
    $region12: #{gcnii_forward.4} parent=5 // pred_fallthru
      _
    %p124 = scmp.lt.s32.totalorder %s9, 2
    // Predicated region
    $region21: #{gcnii_forward.4} parent=5 // pred_check
      %p125 = pneg %p124
    $region22: #{gcnii_forward.4} parent=5 // pred_check_branch
      %127 = sbr.rel (%p125) target = $region24
    $region23: #{gcnii_forward.4} parent=5 // pred_region
      // Predicated region
      $region25: #{gcnii_forward.4} parent=23 // pred_check
        %p128 = pneg %p29
      $region26: #{gcnii_forward.4} parent=23 // pred_check_branch
        %130 = sbr.rel (%p128) target = $region28
      $region27: #{gcnii_forward.4} parent=23 // pred_region
        %s131 = smul.u32 16, %s9
        %p132 = scmp.lt.s32.totalorder %s131, 31
        %s133 = scalar_select %p132, %s131, 31
        %s134 = smul.addr %s133, 4
        %s135 = scalar_lea.vmem %s0, %s134
        %s136 = smul.u32 16, %s9
      $region28: #{gcnii_forward.4} parent=23 // pred_fallthru
        _
    $region24: #{gcnii_forward.4} parent=5 // pred_fallthru
      _
    %p137 = scmp.le.s32.totalorder 1, %s9
    %p138 = scmp.lt.s32.totalorder %s9, 3
    %p139 = pnand %p137, %p138
    %p140 = pneg %p139
    // Predicated region
    $region29: #{gcnii_forward.4} parent=5 // pred_check
      _
    $region30: #{gcnii_forward.4} parent=5 // pred_check_branch
      %142 = sbr.rel (%p139) target = $region32
    $region31: #{gcnii_forward.4} parent=5 // pred_region
      %s143 = ssub.s32 %s9, 1
      %s144 = smul.u32 16, %s14
      %p145 = scmp.lt.s32.totalorder %s144, 31
      %s146 = scalar_select %p145, %s144, 31
      %s147 = smul.addr %s146, 4
      %s148 = scalar_lea.vmem %s0, %s147
      %p149 = pneg %p35
      %p150 = pneg %p32
      %p151 = pneg %p56
      %p152 = pneg %p53
      %p153 = pneg %p77
      %p154 = pneg %p74
      %p155 = pneg %p103
      %p156 = pneg %p100
      %s157 = smul.u32 16, %s14
      %p158 = scmp.lt.s32.totalorder %s157, 31
      %s159 = scalar_select %p158, %s157, 31
      %s160 = smul.addr %s159, 4
      %s161 = scalar_lea.vmem %s3, %s160
      %s162 = smul.u32 16, %s14
      %p163 = scmp.lt.s32.totalorder %s162, 31
      %s164 = scalar_select %p163, %s162, 31
      %s165 = smul.addr %s164, 4
      %s166 = scalar_lea.vmem %s0, %s165
      %s167 = smul.u32 16, %s14
      %s168 = smul.u32 16, %s14
      %p169 = scmp.lt.s32.totalorder %s168, 31
      %s170 = scalar_select %p169, %s168, 31
      %s171 = smul.addr %s170, 4
      %s172 = scalar_lea.vmem %s3, %s171
      %s173 = smul.u32 16, %s14
      %v175 = vld [vmem:[%s166] sm:$0xf]
      %v176 = vld [vmem:[%s166 + $0x4] sm:$0xf]
      %v177 = vld [vmem:[%s166 + $0x8] sm:$0xf]
      %v178 = vld [vmem:[%s166 + $0xc] sm:$0xf]
      %v179 = vld [vmem:[%s166 + $0x10] sm:$0xf]
      %v180 = vld [vmem:[%s166 + $0x14] sm:$0xf]
      %v181 = vld [vmem:[%s166 + $0x18] sm:$0xf]
      %v182 = vld [vmem:[%s166 + $0x1c] sm:$0xf]
      %v183 = vld [vmem:[%s166 + $0x20] sm:$0xf]
      %v184 = vld [vmem:[%s166 + $0x24] sm:$0xf]
      %v185 = vld [vmem:[%s166 + $0x28] sm:$0xf]
      %v186 = vld [vmem:[%s166 + $0x2c] sm:$0xf]
      %v187 = vld [vmem:[%s166 + $0x30] sm:$0xf]
      %v188 = vld [vmem:[%s166 + $0x34] sm:$0xf]
      %v189 = vld [vmem:[%s166 + $0x38] sm:$0xf]
      %v190 = vld [vmem:[%s166 + $0x3c] sm:$0xf]
      %v191 = vld [vmem:[%s1] sm:$0xf]
      %v192 = vld [vmem:[%s1 + $0x4] sm:$0xf]
      %v193 = vld [vmem:[%s1 + $0x8] sm:$0xf]
      %v194 = vld [vmem:[%s1 + $0xc] sm:$0xf]
      %v195 = vld [vmem:[%s1 + $0x10] sm:$0xf]
      %v196 = vld [vmem:[%s1 + $0x14] sm:$0xf]
      %v197 = vld [vmem:[%s1 + $0x18] sm:$0xf]
      %v198 = vld [vmem:[%s1 + $0x1c] sm:$0xf]
      %v199 = vld [vmem:[%s1 + $0x20] sm:$0xf]
      %v200 = vld [vmem:[%s1 + $0x24] sm:$0xf]
      %v201 = vld [vmem:[%s1 + $0x28] sm:$0xf]
      %v202 = vld [vmem:[%s1 + $0x2c] sm:$0xf]
      %v203 = vld [vmem:[%s1 + $0x30] sm:$0xf]
      %v204 = vld [vmem:[%s1 + $0x34] sm:$0xf]
      %v205 = vld [vmem:[%s1 + $0x38] sm:$0xf]
      %v206 = vld [vmem:[%s1 + $0x3c] sm:$0xf]
      %v207 = vld [vmem:[%s2] sm:$0x1]
      %v209 = vlaneseq
      %v210 = vshrl.u32 %v209, 7
      %v211 = vsub.s32 0, %v210
      %v212 = vrot.slane %v207, %v211
      %v230 = vunpack.c.l.b16 %v175
      %v231 = vunpack.c.l.b16 %v176
      %v232 = vunpack.c.l.b16 %v177
      %v233 = vunpack.c.l.b16 %v178
      %v234 = vunpack.c.l.b16 %v179
      %v235 = vunpack.c.l.b16 %v180
      %v236 = vunpack.c.l.b16 %v181
      %v237 = vunpack.c.l.b16 %v182
      %v238 = vunpack.c.l.b16 %v183
      %v239 = vunpack.c.l.b16 %v184
      %v240 = vunpack.c.l.b16 %v185
      %v241 = vunpack.c.l.b16 %v186
      %v242 = vunpack.c.l.b16 %v187
      %v243 = vunpack.c.l.b16 %v188
      %v244 = vunpack.c.l.b16 %v189
      %v245 = vunpack.c.l.b16 %v190
      %v246 = vpack.c.b16 %v231, %v230
      %v247 = vpack.c.b16 %v233, %v232
      %v248 = vpack.c.b16 %v235, %v234
      %v249 = vpack.c.b16 %v237, %v236
      %v250 = vpack.c.b16 %v239, %v238
      %v251 = vpack.c.b16 %v241, %v240
      %v252 = vpack.c.b16 %v243, %v242
      %v253 = vpack.c.b16 %v245, %v244
      %v278 = vunpack.c.l.b16 %v191
      %v279 = vunpack.c.l.b16 %v192
      %v280 = vunpack.c.l.b16 %v193
      %v281 = vunpack.c.l.b16 %v194
      %v282 = vunpack.c.l.b16 %v195
      %v283 = vunpack.c.l.b16 %v196
      %v284 = vunpack.c.l.b16 %v197
      %v285 = vunpack.c.l.b16 %v198
      %v286 = vunpack.c.l.b16 %v199
      %v287 = vunpack.c.l.b16 %v200
      %v288 = vunpack.c.l.b16 %v201
      %v289 = vunpack.c.l.b16 %v202
      %v290 = vunpack.c.l.b16 %v203
      %v291 = vunpack.c.l.b16 %v204
      %v292 = vunpack.c.l.b16 %v205
      %v293 = vunpack.c.l.b16 %v206
      %v294 = vpack.c.b16 %v279, %v278
      %v295 = vpack.c.b16 %v281, %v280
      %v296 = vpack.c.b16 %v283, %v282
      %v297 = vpack.c.b16 %v285, %v284
      %v298 = vpack.c.b16 %v287, %v286
      %v299 = vpack.c.b16 %v289, %v288
      %v300 = vpack.c.b16 %v291, %v290
      %v301 = vpack.c.b16 %v293, %v292
      %310 = vmatprep.subr.bf16.mxu0 0
      %311 = vmatpush1.bf16.msra.mxu0 %v294
      %312 = vmatprep.subr.bf16.mxu0 0
      %313 = vmatpush1.bf16.msra.mxu0 %v295
      %314 = vmatprep.subr.bf16.mxu0 0
      %315 = vmatpush1.bf16.msra.mxu0 %v296
      %316 = vmatprep.subr.bf16.mxu0 0
      %317 = vmatpush1.bf16.msra.mxu0 %v297
      %318 = vmatprep.subr.bf16.mxu0 0
      %319 = vmatpush1.bf16.msra.mxu0 %v298
      %320 = vmatprep.subr.bf16.mxu0 0
      %321 = vmatpush1.bf16.msra.mxu0 %v299
      %322 = vmatprep.subr.bf16.mxu0 0
      %323 = vmatpush1.bf16.msra.mxu0 %v300
      %324 = vmatprep.subr.bf16.mxu0 0
      %325 = vmatpush1.bf16.msra.mxu0 %v301
      %326 = vmatprep.subr.bf16.mxu0 0
      %327 = vmatpush1.bf16.msra.mxu0 0
      %328 = vmatprep.subr.bf16.mxu0 0
      %329 = vmatpush1.bf16.msra.mxu0 0
      %330 = vmatprep.subr.bf16.mxu0 0
      %331 = vmatpush1.bf16.msra.mxu0 0
      %332 = vmatprep.subr.bf16.mxu0 0
      %333 = vmatpush1.bf16.msra.mxu0 0
      %334 = vmatprep.subr.bf16.mxu0 0
      %335 = vmatpush1.bf16.msra.mxu0 0
      %336 = vmatprep.subr.bf16.mxu0 0
      %337 = vmatpush1.bf16.msra.mxu0 0
      %338 = vmatprep.subr.bf16.mxu0 0
      %339 = vmatpush1.bf16.msra.mxu0 0
      %340 = vmatprep.subr.bf16.mxu0 0
      %341 = vmatpush1.bf16.msra.mxu0 0
      %342 = vmatprep.mubr.bf16.mxu0 0
      %343 = vmatmul.mubr.bf16.gmra.mrb[0].mxu0 %v246
      %v344 = vpop.f32.mrb[0].mxu0
      %v345 = vadd.f32 %v212, %v344
      %v346 = vpop.f32.mrb[0].mxu0
      %v347 = vpop.f32.mrb[0].mxu0
      %v348 = vadd.f32 %v212, %v347
      %v349 = vpop.f32.mrb[0].mxu0
      %350 = vmatprep.mubr.bf16.mxu0 0
      %351 = vmatmul.mubr.bf16.gmra.mrb[0].mxu0 %v247
      %v352 = vpop.f32.mrb[0].mxu0
      %v353 = vadd.f32 %v212, %v352
      %v354 = vpop.f32.mrb[0].mxu0
      %v355 = vpop.f32.mrb[0].mxu0
      %v356 = vadd.f32 %v212, %v355
      %v357 = vpop.f32.mrb[0].mxu0
      %358 = vmatprep.mubr.bf16.mxu0 0
      %359 = vmatmul.mubr.bf16.gmra.mrb[0].mxu0 %v248
      %v360 = vpop.f32.mrb[0].mxu0
      %v361 = vadd.f32 %v212, %v360
      %v362 = vpop.f32.mrb[0].mxu0
      %v363 = vpop.f32.mrb[0].mxu0
      %v364 = vadd.f32 %v212, %v363
      %v365 = vpop.f32.mrb[0].mxu0
      %366 = vmatprep.mubr.bf16.mxu0 0
      %367 = vmatmul.mubr.bf16.gmra.mrb[0].mxu0 %v249
      %v368 = vpop.f32.mrb[0].mxu0
      %v369 = vadd.f32 %v212, %v368
      %v370 = vpop.f32.mrb[0].mxu0
      %v371 = vpop.f32.mrb[0].mxu0
      %v372 = vadd.f32 %v212, %v371
      %v373 = vpop.f32.mrb[0].mxu0
      %374 = vmatprep.mubr.bf16.mxu0 0
      %375 = vmatmul.mubr.bf16.gmra.mrb[0].mxu0 %v250
      %v376 = vpop.f32.mrb[0].mxu0
      %v377 = vadd.f32 %v212, %v376
      %v378 = vpop.f32.mrb[0].mxu0
      %v379 = vpop.f32.mrb[0].mxu0
      %v380 = vadd.f32 %v212, %v379
      %v381 = vpop.f32.mrb[0].mxu0
      %382 = vmatprep.mubr.bf16.mxu0 0
      %383 = vmatmul.mubr.bf16.gmra.mrb[0].mxu0 %v251
      %v384 = vpop.f32.mrb[0].mxu0
      %v385 = vadd.f32 %v212, %v384
      %v386 = vpop.f32.mrb[0].mxu0
      %v387 = vpop.f32.mrb[0].mxu0
      %v388 = vadd.f32 %v212, %v387
      %v389 = vpop.f32.mrb[0].mxu0
      %390 = vmatprep.mubr.bf16.mxu0 0
      %391 = vmatmul.mubr.bf16.gmra.mrb[0].mxu0 %v252
      %v392 = vpop.f32.mrb[0].mxu0
      %v393 = vadd.f32 %v212, %v392
      %v394 = vpop.f32.mrb[0].mxu0
      %v395 = vpop.f32.mrb[0].mxu0
      %v396 = vadd.f32 %v212, %v395
      %v397 = vpop.f32.mrb[0].mxu0
      %398 = vmatprep.mubr.bf16.mxu0 0
      %399 = vmatmul.mubr.bf16.gmra.mrb[0].mxu0 %v253
      %v400 = vpop.f32.mrb[0].mxu0
      %v401 = vadd.f32 %v212, %v400
      %v402 = vpop.f32.mrb[0].mxu0
      %v403 = vpop.f32.mrb[0].mxu0
      %v404 = vadd.f32 %v212, %v403
      %v405 = vpop.f32.mrb[0].mxu0
      %406 = vdwg.mxu0
      %v407 = vmax.f32 %v345, 0.0
      %v408 = vmax.f32 %v348, 0.0
      %v409 = vmax.f32 %v353, 0.0
      %v410 = vmax.f32 %v356, 0.0
      %v411 = vmax.f32 %v361, 0.0
      %v412 = vmax.f32 %v364, 0.0
      %v413 = vmax.f32 %v369, 0.0
      %v414 = vmax.f32 %v372, 0.0
      %v415 = vmax.f32 %v377, 0.0
      %v416 = vmax.f32 %v380, 0.0
      %v417 = vmax.f32 %v385, 0.0
      %v418 = vmax.f32 %v388, 0.0
      %v419 = vmax.f32 %v393, 0.0
      %v420 = vmax.f32 %v396, 0.0
      %v421 = vmax.f32 %v401, 0.0
      %v422 = vmax.f32 %v404, 0.0
      %v423 = vpack.c.bf16 %v408, %v407
      %v424 = vpack.c.bf16 %v410, %v409
      %v425 = vpack.c.bf16 %v412, %v411
      %v426 = vpack.c.bf16 %v414, %v413
      %v427 = vpack.c.bf16 %v416, %v415
      %v428 = vpack.c.bf16 %v418, %v417
      %v429 = vpack.c.bf16 %v420, %v419
      %v430 = vpack.c.bf16 %v422, %v421
      %v439 = vunpack.c.l.b16 %v423
      %v440 = vunpack.c.h.b16 %v423
      %v441 = vunpack.c.l.b16 %v424
      %v442 = vunpack.c.h.b16 %v424
      %v443 = vunpack.c.l.b16 %v425
      %v444 = vunpack.c.h.b16 %v425
      %v445 = vunpack.c.l.b16 %v426
      %v446 = vunpack.c.h.b16 %v426
      %v447 = vunpack.c.l.b16 %v427
      %v448 = vunpack.c.h.b16 %v427
      %v449 = vunpack.c.l.b16 %v428
      %v450 = vunpack.c.h.b16 %v428
      %v451 = vunpack.c.l.b16 %v429
      %v452 = vunpack.c.h.b16 %v429
      %v453 = vunpack.c.l.b16 %v430
      %v454 = vunpack.c.h.b16 %v430
      %v455 = vpack.c.b16 %v439, %v439
      %v456 = vpack.c.b16 %v440, %v440
      %v457 = vpack.c.b16 %v441, %v441
      %v458 = vpack.c.b16 %v442, %v442
      %v459 = vpack.c.b16 %v443, %v443
      %v460 = vpack.c.b16 %v444, %v444
      %v461 = vpack.c.b16 %v445, %v445
      %v462 = vpack.c.b16 %v446, %v446
      %v463 = vpack.c.b16 %v447, %v447
      %v464 = vpack.c.b16 %v448, %v448
      %v465 = vpack.c.b16 %v449, %v449
      %v466 = vpack.c.b16 %v450, %v450
      %v467 = vpack.c.b16 %v451, %v451
      %v468 = vpack.c.b16 %v452, %v452
      %v469 = vpack.c.b16 %v453, %v453
      %v470 = vpack.c.b16 %v454, %v454
      %487 = vst [vmem:[%s172] sm:$0xf] %v455
      %488 = vst [vmem:[%s172 + $0x4] sm:$0xf] %v456
      %489 = vst [vmem:[%s172 + $0x8] sm:$0xf] %v457
      %490 = vst [vmem:[%s172 + $0xc] sm:$0xf] %v458
      %491 = vst [vmem:[%s172 + $0x10] sm:$0xf] %v459
      %492 = vst [vmem:[%s172 + $0x14] sm:$0xf] %v460
      %493 = vst [vmem:[%s172 + $0x18] sm:$0xf] %v461
      %494 = vst [vmem:[%s172 + $0x1c] sm:$0xf] %v462
      %495 = vst [vmem:[%s172 + $0x20] sm:$0xf] %v463
      %496 = vst [vmem:[%s172 + $0x24] sm:$0xf] %v464
      %497 = vst [vmem:[%s172 + $0x28] sm:$0xf] %v465
      %498 = vst [vmem:[%s172 + $0x2c] sm:$0xf] %v466
      %499 = vst [vmem:[%s172 + $0x30] sm:$0xf] %v467
      %500 = vst [vmem:[%s172 + $0x34] sm:$0xf] %v468
      %501 = vst [vmem:[%s172 + $0x38] sm:$0xf] %v469
      %502 = vst [vmem:[%s172 + $0x3c] sm:$0xf] %v470
      %s503 = smul.u32 16, %s14
      %p504 = scmp.lt.s32.totalorder %s503, 31
      %s505 = scalar_select %p504, %s503, 31
      %s506 = smul.addr %s505, 4
      %s507 = scalar_lea.vmem %s3, %s506
      // Predicated region
      $region33: #{gcnii_forward.4} parent=31 // pred_check
        %p508 = pneg %p100
      $region34: #{gcnii_forward.4} parent=31 // pred_check_branch
        %510 = sbr.rel (%p508) target = $region36
      $region35: #{gcnii_forward.4} parent=31 // pred_region
        %s511 = smul.u32 16, %s14
      $region36: #{gcnii_forward.4} parent=31 // pred_fallthru
        _
    $region32: #{gcnii_forward.4} parent=5 // pred_fallthru
      _
    %p512 = scmp.le.s32.totalorder 2, %s9
    // Predicated region
    $region37: #{gcnii_forward.4} parent=5 // pred_check
      %p513 = pneg %p512
    $region38: #{gcnii_forward.4} parent=5 // pred_check_branch
      %515 = sbr.rel (%p513) target = $region40
    $region39: #{gcnii_forward.4} parent=5 // pred_region
      %s516 = ssub.s32 %s9, 2
      // Predicated region
      $region41: #{gcnii_forward.4} parent=39 // pred_check
        %p517 = pneg %p106
      $region42: #{gcnii_forward.4} parent=39 // pred_check_branch
        %519 = sbr.rel (%p517) target = $region44
      $region43: #{gcnii_forward.4} parent=39 // pred_region
        %s520 = smul.u32 16, %s15
        %p521 = scmp.lt.s32.totalorder %s520, 31
        %s522 = scalar_select %p521, %s520, 31
        %s523 = smul.addr %s522, 4
        %s524 = scalar_lea.vmem %s3, %s523
      $region44: #{gcnii_forward.4} parent=39 // pred_fallthru
        _
    $region40: #{gcnii_forward.4} parent=5 // pred_fallthru
      _
  $region6: #{gcnii_forward.4} parent=0 // loop_footer
    %s13 = sadd.s32 1, %s9
  $region7: #{gcnii_forward.4} parent=0 // loop_footer_branch
    %8 = sbr.rel target = $region3
  $region8: #{gcnii_forward.4} parent=0 // loop_exit
    _

// kernel: gcnii_forward.5
$region0: #{gcnii_forward.5}
  #allocation0 [shape = 'u32[]', space=smem, size = 0x4, offset = 0x4, fixed_abs, tag = 'smem constant byte address 0x4 - core index']
  #allocation1 [shape = 'u32[144,128]{1,0:T(1,128)}', space=vmem, size = 0x12000, scoped, tag = 'internal scratch']
  #allocation2 [shape = 'f32[128,128]{1,0:T(8,128)}', space=vmem, size = 0x10000, scoped, tag = 'scratch operand']
  #allocation3 [shape = 's32[1]{0}', space=sflag, size = 0x4, scoped, tag = 'scoped memory for gcnii_forward.5']
  #allocation4 [shape = 'u8[512]{0}', space=smem, size = 0x200, scoped, tag = 'prefetched SMEM operand 0']
  %s0 = inlined_call_operand.vmem [shape: f32[2], index: 0, kind: input, shape index: {}]
  %s1 = inlined_call_operand.vmem [shape: bf16[256,256], index: 1, kind: input, shape index: {}]
  %s2 = inlined_call_operand.vmem [shape: bf16[256,128], index: 2, kind: input, shape index: {}, may-alias: {2,3}]
  %s3 = inlined_call_operand.vmem [shape: bf16[256,128], index: 3, kind: input, shape index: {}, may-alias: {2,3}]
  %s4 = inlined_call_operand.vmem [shape: bf16[128,128], index: 4, kind: input, shape index: {}]
  %s5 = inlined_call_operand.vmem [shape: bf16[256,128], index: 5, kind: output, shape index: {}]
  %s6 = sld [smem:[#allocation0]]
  $region98: #{gcnii_forward.5} parent=0
    _
  %s8 = ssub.s32 1, %s6
  %s9 = scalar_select 0, %s8, %s6
  %s10 = sshll.u32 %s0, 4
  %s11 = int_to_ptr.vmem [resolvable:$true] %s10
  %13 = dma.vmem_to_smem %s11, 16, [#allocation4], [#allocation3]
  %14 = dma.done [#allocation3], 16
  %15 = sfence
  $region1: #{gcnii_forward.5} parent=0
    #allocation5 [shape = 'u8[65536]{0}', space=vmem, size = 0x10000, scoped, tag = 'input window, operand 1']
    loop: start=0, step=1, limit=6
    $region2: #{gcnii_forward.5} parent=1 // loop_pre_header
      _
    $region3: #{gcnii_forward.5} parent=1 // loop_header
      %s17 = sphi 0, %s21
      %p18 = scmp.ge.s32.totalorder %s17, 6
      %s24 = sphi 0, %s36
      %s25 = sphi 0, %s32
      %s26 = sphi 0, %s24
      %s27 = sphi 0, %s25
      %s28 = sphi 0, %s26
      %s29 = sphi 0, %s27
      %s41 = sphi 0, %s43
      %s44 = sphi 0, %s41
      %s45 = sphi 0, %s44
      %s61 = sphi 0, %s45
      %s67 = sphi 0, %s69
      %s70 = sphi 0, %s67
      %s71 = sphi 0, %s70
      %s87 = sphi 0, %s71
      %s93 = sphi 0, %s95
      %s96 = sphi 0, %s93
      %s97 = sphi 0, %s96
      %s113 = sphi 0, %s97
      %s117 = sphi 0, %s117
      %s119 = sphi 0, %s117
      %s120 = sphi 0, %s119
      %s134 = sphi 0, %s120
      %s140 = sphi 0, %s142
      %s143 = sphi 0, %s140
      %s144 = sphi 0, %s143
      %s160 = sphi 0, %s144
    $region4: #{gcnii_forward.5} parent=1 // loop_header_branch
      %20 = sbr.rel (%p18) target = $region8
    $region5: #{gcnii_forward.5} parent=1 // loop_body
      %s22 = ssub.s32 %s17, 1
      %s23 = ssub.s32 %s17, 2
      %s30 = sadd.s32 1, %s25
      %p31 = scmp.ge.s32.totalorder %s30, 2
      %s32 = scalar_select %p31, 0, %s30
      %s33 = sadd.s32 1, %s24
      %s34 = scalar_select %p31, %s33, %s24
      %p35 = scmp.ge.s32.totalorder %s34, 2
      %s36 = scalar_select %p35, 0, %s34
      %s37 = ssub.s32 %s24, %s36
      %s38 = ssub.s32 %s25, %s32
      %s39 = sor.u32 %s37, %s38
      %p40 = scmp.eq.s32.totalorder %s39, 0
      %s42 = sadd.s32 %s41, 1
      %s43 = scalar_select %p40, %s41, %s42
      %p46 = pneg %p40
      %p47 = scmp.eq.s32.totalorder %s17, 3
      %p48 = por %p46, %p47
      %p49 = scmp.ne.s32.totalorder %s41, %s44
      %p50 = scmp.eq.s32.totalorder %s17, 0
      %p51 = por %p49, %p50
      %p52 = scmp.ne.s32.totalorder %s41, %s44
      %p53 = scmp.eq.s32.totalorder %s22, 3
      %p54 = por %p52, %p53
      %p55 = scmp.ne.s32.totalorder %s44, %s45
      %p56 = scmp.eq.s32.totalorder %s22, 0
      %p57 = por %p55, %p56
      %p58 = scmp.ne.s32.totalorder %s44, %s45
      %p59 = scmp.eq.s32.totalorder %s23, 3
      %p60 = por %p58, %p59
      %p62 = scmp.ne.s32.totalorder %s45, %s61
      %p63 = scmp.eq.s32.totalorder %s23, 0
      %p64 = por %p62, %p63
      %s65 = ssub.s32 %s25, %s32
      %p66 = scmp.eq.s32.totalorder %s65, 0
      %s68 = sadd.s32 %s67, 1
      %s69 = scalar_select %p66, %s67, %s68
      %p72 = pneg %p66
      %p73 = scmp.eq.s32.totalorder %s17, 3
      %p74 = por %p72, %p73
      %p75 = scmp.ne.s32.totalorder %s67, %s70
      %p76 = scmp.eq.s32.totalorder %s17, 0
      %p77 = por %p75, %p76
      %p78 = scmp.ne.s32.totalorder %s67, %s70
      %p79 = scmp.eq.s32.totalorder %s22, 3
      %p80 = por %p78, %p79
      %p81 = scmp.ne.s32.totalorder %s70, %s71
      %p82 = scmp.eq.s32.totalorder %s22, 0
      %p83 = por %p81, %p82
      %p84 = scmp.ne.s32.totalorder %s70, %s71
      %p85 = scmp.eq.s32.totalorder %s23, 3
      %p86 = por %p84, %p85
      %p88 = scmp.ne.s32.totalorder %s71, %s87
      %p89 = scmp.eq.s32.totalorder %s23, 0
      %p90 = por %p88, %p89
      %s91 = ssub.s32 %s24, %s36
      %p92 = scmp.eq.s32.totalorder %s91, 0
      %s94 = sadd.s32 %s93, 1
      %s95 = scalar_select %p92, %s93, %s94
      %p98 = pneg %p92
      %p99 = scmp.eq.s32.totalorder %s17, 3
      %p100 = por %p98, %p99
      %p101 = scmp.ne.s32.totalorder %s93, %s96
      %p102 = scmp.eq.s32.totalorder %s17, 0
      %p103 = por %p101, %p102
      %p104 = scmp.ne.s32.totalorder %s93, %s96
      %p105 = scmp.eq.s32.totalorder %s22, 3
      %p106 = por %p104, %p105
      %p107 = scmp.ne.s32.totalorder %s96, %s97
      %p108 = scmp.eq.s32.totalorder %s22, 0
      %p109 = por %p107, %p108
      %p110 = scmp.ne.s32.totalorder %s96, %s97
      %p111 = scmp.eq.s32.totalorder %s23, 3
      %p112 = por %p110, %p111
      %p114 = scmp.ne.s32.totalorder %s97, %s113
      %p115 = scmp.eq.s32.totalorder %s23, 0
      %p116 = por %p114, %p115
      %s118 = sadd.s32 %s117, 1
      %p121 = scmp.eq.s32.totalorder %s17, 3
      %p122 = scmp.ne.s32.totalorder %s117, %s119
      %p123 = scmp.eq.s32.totalorder %s17, 0
      %p124 = por %p122, %p123
      %p125 = scmp.ne.s32.totalorder %s117, %s119
      %p126 = scmp.eq.s32.totalorder %s22, 3
      %p127 = por %p125, %p126
      %p128 = scmp.ne.s32.totalorder %s119, %s120
      %p129 = scmp.eq.s32.totalorder %s22, 0
      %p130 = por %p128, %p129
      %p131 = scmp.ne.s32.totalorder %s119, %s120
      %p132 = scmp.eq.s32.totalorder %s23, 3
      %p133 = por %p131, %p132
      %p135 = scmp.ne.s32.totalorder %s120, %s134
      %p136 = scmp.eq.s32.totalorder %s23, 0
      %p137 = por %p135, %p136
      %s138 = ssub.s32 %s24, %s36
      %p139 = scmp.eq.s32.totalorder %s138, 0
      %s141 = sadd.s32 %s140, 1
      %s142 = scalar_select %p139, %s140, %s141
      %p145 = pneg %p139
      %p146 = scmp.eq.s32.totalorder %s17, 3
      %p147 = por %p145, %p146
      %p148 = scmp.ne.s32.totalorder %s140, %s143
      %p149 = scmp.eq.s32.totalorder %s17, 0
      %p150 = por %p148, %p149
      %p151 = scmp.ne.s32.totalorder %s140, %s143
      %p152 = scmp.eq.s32.totalorder %s22, 3
      %p153 = por %p151, %p152
      %p154 = scmp.ne.s32.totalorder %s143, %s144
      %p155 = scmp.eq.s32.totalorder %s22, 0
      %p156 = por %p154, %p155
      %p157 = scmp.ne.s32.totalorder %s143, %s144
      %p158 = scmp.eq.s32.totalorder %s23, 3
      %p159 = por %p157, %p158
      %p161 = scmp.ne.s32.totalorder %s144, %s160
      %p162 = scmp.eq.s32.totalorder %s23, 0
      %p163 = por %p161, %p162
      %p164 = scmp.le.s32.totalorder 1, %s17
      %p165 = scmp.lt.s32.totalorder %s17, 5
      %p166 = pnand %p164, %p165
      %p167 = pneg %p166
      // Predicated region
      $region9: #{gcnii_forward.5} parent=5 // pred_check
        _
      $region10: #{gcnii_forward.5} parent=5 // pred_check_branch
        %169 = sbr.rel (%p166) target = $region12
      $region11: #{gcnii_forward.5} parent=5 // pred_region
        %s170 = ssub.s32 %s17, 1
        // Predicated region
        $region13: #{gcnii_forward.5} parent=11 // pred_check
          %p171 = pneg %p130
        $region14: #{gcnii_forward.5} parent=11 // pred_check_branch
          %173 = sbr.rel (%p171) target = $region16
        $region15: #{gcnii_forward.5} parent=11 // pred_region
          _
        $region16: #{gcnii_forward.5} parent=11 // pred_fallthru
          _
      $region12: #{gcnii_forward.5} parent=5 // pred_fallthru
        _
      %p174 = scmp.lt.s32.totalorder %s17, 4
      // Predicated region
      $region17: #{gcnii_forward.5} parent=5 // pred_check
        %p175 = pneg %p174
      $region18: #{gcnii_forward.5} parent=5 // pred_check_branch
        %177 = sbr.rel (%p175) target = $region20
      $region19: #{gcnii_forward.5} parent=5 // pred_region
        // Predicated region
        $region21: #{gcnii_forward.5} parent=19 // pred_check
          %p178 = pneg %p51
        $region22: #{gcnii_forward.5} parent=19 // pred_check_branch
          %180 = sbr.rel (%p178) target = $region24
        $region23: #{gcnii_forward.5} parent=19 // pred_region
          %s181 = sand.u32 %s41, 1
          %s182 = sand.u32 %s41, 1
          %s183 = smul.addr %s182, 64
          %s184 = scalar_lea.vmem [#allocation5], %s183
          %s185 = smul.u32 16, %s24
          %s186 = smul.addr %s185, 2
          %s187 = sadd.s32 %s25, %s186
          %s188 = smul.addr %s187, 4
          %s189 = scalar_lea.vmem %s1, %s188
          // Predicated region
          $region25: #{gcnii_forward.5} parent=23 // pred_check
            _
          $region26: #{gcnii_forward.5} parent=23 // pred_check_branch
            %191 = sbr.rel (0) target = $region28
          $region27: #{gcnii_forward.5} parent=23 // pred_region
            // Predicated region
            $region29: #{gcnii_forward.5} parent=27 // pred_check
              _
            $region30: #{gcnii_forward.5} parent=27 // pred_check_branch
              %193 = sbr.rel target = $region32
            $region31: #{gcnii_forward.5} parent=27 // pred_region
              // Predicated region
              $region44: #{gcnii_forward.5} parent=31 // pred_check
                _
              $region45: #{gcnii_forward.5} parent=31 // pred_check_branch
                %238 = sbr.rel (0) target = $region47
              $region46: #{gcnii_forward.5} parent=31 // pred_region
                loop: start=0, step=1, limit=1
                $region48: #{gcnii_forward.5} parent=46 // loop_pre_header
                  _
                $region49: #{gcnii_forward.5} parent=46 // loop_header
                  %s240 = sphi 0, %s244
                  %p241 = scmp.ge.s32.totalorder %s240, 1
                  %s245 = sphi %s189, %s189
                  %s246 = sphi %s184, %s184
                $region50: #{gcnii_forward.5} parent=46 // loop_header_branch
                  %243 = sbr.rel (%p241) target = $region54
                $region51: #{gcnii_forward.5} parent=46 // loop_body
                  _
                $region52: #{gcnii_forward.5} parent=46 // loop_footer
                  %s244 = sadd.s32 1, %s240
                $region53: #{gcnii_forward.5} parent=46 // loop_footer_branch
                  %239 = sbr.rel target = $region49
                $region54: #{gcnii_forward.5} parent=46 // loop_exit
                  _
                loop: start=0, step=1, limit=1
                $region55: #{gcnii_forward.5} parent=46 // loop_pre_header
                  _
                $region56: #{gcnii_forward.5} parent=46 // loop_header
                  %s249 = sphi 0, %s253
                  %p250 = scmp.ge.s32.totalorder %s249, 1
                  %s254 = sphi %s189, %s189
                  %s255 = sphi %s184, %s184
                $region57: #{gcnii_forward.5} parent=46 // loop_header_branch
                  %252 = sbr.rel (%p250) target = $region61
                $region58: #{gcnii_forward.5} parent=46 // loop_body
                  %v256 = vld [vmem:[%s254] sm:$0xf]
                  %257 = vst [vmem:[%s255] sm:$0xf] %v256
                  %v258 = vld [vmem:[%s254 + $0x8] sm:$0xf]
                  %259 = vst [vmem:[%s255 + $0x4] sm:$0xf] %v258
                  %v260 = vld [vmem:[%s254 + $0x10] sm:$0xf]
                  %261 = vst [vmem:[%s255 + $0x8] sm:$0xf] %v260
                  %v262 = vld [vmem:[%s254 + $0x18] sm:$0xf]
                  %263 = vst [vmem:[%s255 + $0xc] sm:$0xf] %v262
                  %v264 = vld [vmem:[%s254 + $0x20] sm:$0xf]
                  %265 = vst [vmem:[%s255 + $0x10] sm:$0xf] %v264
                  %v266 = vld [vmem:[%s254 + $0x28] sm:$0xf]
                  %267 = vst [vmem:[%s255 + $0x14] sm:$0xf] %v266
                  %v268 = vld [vmem:[%s254 + $0x30] sm:$0xf]
                  %269 = vst [vmem:[%s255 + $0x18] sm:$0xf] %v268
                  %v270 = vld [vmem:[%s254 + $0x38] sm:$0xf]
                  %271 = vst [vmem:[%s255 + $0x1c] sm:$0xf] %v270
                  %v272 = vld [vmem:[%s254 + $0x40] sm:$0xf]
                  %273 = vst [vmem:[%s255 + $0x20] sm:$0xf] %v272
                  %v274 = vld [vmem:[%s254 + $0x48] sm:$0xf]
                  %275 = vst [vmem:[%s255 + $0x24] sm:$0xf] %v274
                  %v276 = vld [vmem:[%s254 + $0x50] sm:$0xf]
                  %277 = vst [vmem:[%s255 + $0x28] sm:$0xf] %v276
                  %v278 = vld [vmem:[%s254 + $0x58] sm:$0xf]
                  %279 = vst [vmem:[%s255 + $0x2c] sm:$0xf] %v278
                  %v280 = vld [vmem:[%s254 + $0x60] sm:$0xf]
                  %281 = vst [vmem:[%s255 + $0x30] sm:$0xf] %v280
                  %v282 = vld [vmem:[%s254 + $0x68] sm:$0xf]
                  %283 = vst [vmem:[%s255 + $0x34] sm:$0xf] %v282
                  %v284 = vld [vmem:[%s254 + $0x70] sm:$0xf]
                  %285 = vst [vmem:[%s255 + $0x38] sm:$0xf] %v284
                  %v286 = vld [vmem:[%s254 + $0x78] sm:$0xf]
                  %287 = vst [vmem:[%s255 + $0x3c] sm:$0xf] %v286
                $region59: #{gcnii_forward.5} parent=46 // loop_footer
                  %s253 = sadd.s32 1, %s249
                $region60: #{gcnii_forward.5} parent=46 // loop_footer_branch
                  %248 = sbr.rel target = $region56
                $region61: #{gcnii_forward.5} parent=46 // loop_exit
                  _
              $region47: #{gcnii_forward.5} parent=31 // pred_fallthru
                _
            $region32: #{gcnii_forward.5} parent=27 // pred_fallthru
              _
            // Predicated region
            $region33: #{gcnii_forward.5} parent=27 // pred_check
              _
            $region34: #{gcnii_forward.5} parent=27 // pred_check_branch
              %195 = sbr.rel (0) target = $region36
            $region35: #{gcnii_forward.5} parent=27 // pred_region
              loop: start=0, step=1, limit=1
              $region37: #{gcnii_forward.5} parent=35 // loop_pre_header
                _
              $region38: #{gcnii_forward.5} parent=35 // loop_header
                %s198 = sphi 0, %s202
                %p199 = scmp.ge.s32.totalorder %s198, 1
                %s203 = sphi %s189, %s189
                %s204 = sphi %s184, %s184
              $region39: #{gcnii_forward.5} parent=35 // loop_header_branch
                %201 = sbr.rel (%p199) target = $region43
              $region40: #{gcnii_forward.5} parent=35 // loop_body
                %v205 = vld [vmem:[%s203] sm:$0xf]
                %206 = vst [vmem:[%s204] sm:$0xf] %v205
                %v207 = vld [vmem:[%s203 + $0x8] sm:$0xf]
                %208 = vst [vmem:[%s204 + $0x4] sm:$0xf] %v207
                %v209 = vld [vmem:[%s203 + $0x10] sm:$0xf]
                %210 = vst [vmem:[%s204 + $0x8] sm:$0xf] %v209
                %v211 = vld [vmem:[%s203 + $0x18] sm:$0xf]
                %212 = vst [vmem:[%s204 + $0xc] sm:$0xf] %v211
                %v213 = vld [vmem:[%s203 + $0x20] sm:$0xf]
                %214 = vst [vmem:[%s204 + $0x10] sm:$0xf] %v213
                %v215 = vld [vmem:[%s203 + $0x28] sm:$0xf]
                %216 = vst [vmem:[%s204 + $0x14] sm:$0xf] %v215
                %v217 = vld [vmem:[%s203 + $0x30] sm:$0xf]
                %218 = vst [vmem:[%s204 + $0x18] sm:$0xf] %v217
                %v219 = vld [vmem:[%s203 + $0x38] sm:$0xf]
                %220 = vst [vmem:[%s204 + $0x1c] sm:$0xf] %v219
                %v221 = vld [vmem:[%s203 + $0x40] sm:$0xf]
                %222 = vst [vmem:[%s204 + $0x20] sm:$0xf] %v221
                %v223 = vld [vmem:[%s203 + $0x48] sm:$0xf]
                %224 = vst [vmem:[%s204 + $0x24] sm:$0xf] %v223
                %v225 = vld [vmem:[%s203 + $0x50] sm:$0xf]
                %226 = vst [vmem:[%s204 + $0x28] sm:$0xf] %v225
                %v227 = vld [vmem:[%s203 + $0x58] sm:$0xf]
                %228 = vst [vmem:[%s204 + $0x2c] sm:$0xf] %v227
                %v229 = vld [vmem:[%s203 + $0x60] sm:$0xf]
                %230 = vst [vmem:[%s204 + $0x30] sm:$0xf] %v229
                %v231 = vld [vmem:[%s203 + $0x68] sm:$0xf]
                %232 = vst [vmem:[%s204 + $0x34] sm:$0xf] %v231
                %v233 = vld [vmem:[%s203 + $0x70] sm:$0xf]
                %234 = vst [vmem:[%s204 + $0x38] sm:$0xf] %v233
                %v235 = vld [vmem:[%s203 + $0x78] sm:$0xf]
                %236 = vst [vmem:[%s204 + $0x3c] sm:$0xf] %v235
              $region41: #{gcnii_forward.5} parent=35 // loop_footer
                %s202 = sadd.s32 1, %s198
              $region42: #{gcnii_forward.5} parent=35 // loop_footer_branch
                %197 = sbr.rel target = $region38
              $region43: #{gcnii_forward.5} parent=35 // loop_exit
                _
            $region36: #{gcnii_forward.5} parent=27 // pred_fallthru
              _
          $region28: #{gcnii_forward.5} parent=23 // pred_fallthru
            _
          %288 = vnop
        $region24: #{gcnii_forward.5} parent=19 // pred_fallthru
          _
        // Predicated region
        $region62: #{gcnii_forward.5} parent=19 // pred_check
          %p289 = pneg %p77
        $region63: #{gcnii_forward.5} parent=19 // pred_check_branch
          %291 = sbr.rel (%p289) target = $region65
        $region64: #{gcnii_forward.5} parent=19 // pred_region
          %s292 = smul.u32 16, %s25
          %p293 = scmp.lt.s32.totalorder %s292, 31
          %s294 = scalar_select %p293, %s292, 31
          %s295 = smul.addr %s294, 4
          %s296 = scalar_lea.vmem %s2, %s295
          %s297 = smul.u32 16, %s25
        $region65: #{gcnii_forward.5} parent=19 // pred_fallthru
          _
        // Predicated region
        $region66: #{gcnii_forward.5} parent=19 // pred_check
          %p298 = pneg %p103
        $region67: #{gcnii_forward.5} parent=19 // pred_check_branch
          %300 = sbr.rel (%p298) target = $region69
        $region68: #{gcnii_forward.5} parent=19 // pred_region
          %s301 = smul.u32 16, %s24
          %p302 = scmp.lt.s32.totalorder %s301, 31
          %s303 = scalar_select %p302, %s301, 31
          %s304 = smul.addr %s303, 4
          %s305 = scalar_lea.vmem %s3, %s304
          %s306 = smul.u32 16, %s24
        $region69: #{gcnii_forward.5} parent=19 // pred_fallthru
          _
      $region20: #{gcnii_forward.5} parent=5 // pred_fallthru
        _
      %p307 = scmp.le.s32.totalorder 1, %s17
      %p308 = scmp.lt.s32.totalorder %s17, 5
      %p309 = pnand %p307, %p308
      %p310 = pneg %p309
      // Predicated region
      $region70: #{gcnii_forward.5} parent=5 // pred_check
        _
      $region71: #{gcnii_forward.5} parent=5 // pred_check_branch
        %312 = sbr.rel (%p309) target = $region73
      $region72: #{gcnii_forward.5} parent=5 // pred_region
        %s313 = ssub.s32 %s17, 1
        %s314 = sand.u32 %s44, 1
        %s315 = sand.u32 %s44, 1
        %s316 = smul.addr %s315, 64
        %s317 = scalar_lea.vmem [#allocation5], %s316
        // Predicated region
        $region74: #{gcnii_forward.5} parent=72 // pred_check
          %p318 = pneg %p57
        $region75: #{gcnii_forward.5} parent=72 // pred_check_branch
          %320 = sbr.rel (%p318) target = $region77
        $region76: #{gcnii_forward.5} parent=72 // pred_region
          _
        $region77: #{gcnii_forward.5} parent=72 // pred_fallthru
          _
        %s321 = sand.u32 %s44, 1
        %s322 = sand.u32 %s44, 1
        %s323 = smul.addr %s322, 64
        %s324 = scalar_lea.vmem [#allocation5], %s323
        %p325 = pneg %p57
        %p326 = pneg %p54
        %s327 = smul.u32 16, %s27
        %p328 = scmp.lt.s32.totalorder %s327, 31
        %s329 = scalar_select %p328, %s327, 31
        %s330 = smul.addr %s329, 4
        %s331 = scalar_lea.vmem %s2, %s330
        %p332 = pneg %p83
        %p333 = pneg %p80
        %s334 = smul.u32 16, %s26
        %p335 = scmp.lt.s32.totalorder %s334, 31
        %s336 = scalar_select %p335, %s334, 31
        %s337 = smul.addr %s336, 4
        %s338 = scalar_lea.vmem %s3, %s337
        %p339 = pneg %p109
        %p340 = pneg %p106
        %p341 = pneg %p130
        %p342 = pneg %p127
        %p343 = pneg %p156
        %p344 = pneg %p153
        %s345 = smul.u32 16, %s26
        %p346 = scmp.lt.s32.totalorder %s345, 31
        %s347 = scalar_select %p346, %s345, 31
        %s348 = smul.addr %s347, 4
        %s349 = scalar_lea.vmem %s5, %s348
        %s350 = smul.u32 16, %s26
        %s351 = smul.u32 16, %s27
        %p352 = scmp.lt.s32.totalorder %s351, 31
        %s353 = scalar_select %p352, %s351, 31
        %s354 = smul.addr %s353, 4
        %s355 = scalar_lea.vmem %s2, %s354
        %s356 = smul.u32 16, %s27
        %s357 = smul.u32 16, %s26
        %p358 = scmp.lt.s32.totalorder %s357, 31
        %s359 = scalar_select %p358, %s357, 31
        %s360 = smul.addr %s359, 4
        %s361 = scalar_lea.vmem %s3, %s360
        %s362 = smul.u32 16, %s26
        %s363 = smul.u32 16, %s26
        %p364 = scmp.lt.s32.totalorder %s363, 31
        %s365 = scalar_select %p364, %s363, 31
        %s366 = smul.addr %s365, 4
        %s367 = scalar_lea.vmem %s5, %s366
        %s368 = smul.u32 16, %s26
        %p370 = scmp.eq.s32.totalorder %s27, 0
        // Predicated region
        $region78: #{gcnii_forward.5} parent=72 // pred_check
          %p371 = pneg %p370
        $region79: #{gcnii_forward.5} parent=72 // pred_check_branch
          %373 = sbr.rel (%p371) target = $region81
        $region80: #{gcnii_forward.5} parent=72 // pred_region
          %374 = vst [vmem:[#allocation2] sm:$0xff] 0.0
          %375 = vst [vmem:[#allocation2 + $0x8] sm:$0xff] 0.0
          %376 = vst [vmem:[#allocation2 + $0x10] sm:$0xff] 0.0
          %377 = vst [vmem:[#allocation2 + $0x18] sm:$0xff] 0.0
          %378 = vst [vmem:[#allocation2 + $0x20] sm:$0xff] 0.0
          %379 = vst [vmem:[#allocation2 + $0x28] sm:$0xff] 0.0
          %380 = vst [vmem:[#allocation2 + $0x30] sm:$0xff] 0.0
          %381 = vst [vmem:[#allocation2 + $0x38] sm:$0xff] 0.0
          %382 = vst [vmem:[#allocation2 + $0x40] sm:$0xff] 0.0
          %383 = vst [vmem:[#allocation2 + $0x48] sm:$0xff] 0.0
          %384 = vst [vmem:[#allocation2 + $0x50] sm:$0xff] 0.0
          %385 = vst [vmem:[#allocation2 + $0x58] sm:$0xff] 0.0
          %386 = vst [vmem:[#allocation2 + $0x60] sm:$0xff] 0.0
          %387 = vst [vmem:[#allocation2 + $0x68] sm:$0xff] 0.0
          %388 = vst [vmem:[#allocation2 + $0x70] sm:$0xff] 0.0
          %389 = vst [vmem:[#allocation2 + $0x78] sm:$0xff] 0.0
        $region81: #{gcnii_forward.5} parent=72 // pred_fallthru
          _
        %v390 = vld [vmem:[#allocation2] sm:$0xff]
        %v391 = vld [vmem:[#allocation2 + $0x8] sm:$0xff]
        %v392 = vld [vmem:[#allocation2 + $0x10] sm:$0xff]
        %v393 = vld [vmem:[#allocation2 + $0x18] sm:$0xff]
        %v394 = vld [vmem:[#allocation2 + $0x20] sm:$0xff]
        %v395 = vld [vmem:[#allocation2 + $0x28] sm:$0xff]
        %v396 = vld [vmem:[#allocation2 + $0x30] sm:$0xff]
        %v397 = vld [vmem:[#allocation2 + $0x38] sm:$0xff]
        %v398 = vld [vmem:[#allocation2 + $0x40] sm:$0xff]
        %v399 = vld [vmem:[#allocation2 + $0x48] sm:$0xff]
        %v400 = vld [vmem:[#allocation2 + $0x50] sm:$0xff]
        %v401 = vld [vmem:[#allocation2 + $0x58] sm:$0xff]
        %v402 = vld [vmem:[#allocation2 + $0x60] sm:$0xff]
        %v403 = vld [vmem:[#allocation2 + $0x68] sm:$0xff]
        %v404 = vld [vmem:[#allocation2 + $0x70] sm:$0xff]
        %v405 = vld [vmem:[#allocation2 + $0x78] sm:$0xff]
        %v406 = vld [vmem:[%s317] sm:$0xf]
        %v407 = vld [vmem:[%s317 + $0x4] sm:$0xf]
        %v408 = vld [vmem:[%s317 + $0x8] sm:$0xf]
        %v409 = vld [vmem:[%s317 + $0xc] sm:$0xf]
        %v410 = vld [vmem:[%s317 + $0x10] sm:$0xf]
        %v411 = vld [vmem:[%s317 + $0x14] sm:$0xf]
        %v412 = vld [vmem:[%s317 + $0x18] sm:$0xf]
        %v413 = vld [vmem:[%s317 + $0x1c] sm:$0xf]
        %v414 = vld [vmem:[%s317 + $0x20] sm:$0xf]
        %v415 = vld [vmem:[%s317 + $0x24] sm:$0xf]
        %v416 = vld [vmem:[%s317 + $0x28] sm:$0xf]
        %v417 = vld [vmem:[%s317 + $0x2c] sm:$0xf]
        %v418 = vld [vmem:[%s317 + $0x30] sm:$0xf]
        %v419 = vld [vmem:[%s317 + $0x34] sm:$0xf]
        %v420 = vld [vmem:[%s317 + $0x38] sm:$0xf]
        %v421 = vld [vmem:[%s317 + $0x3c] sm:$0xf]
        %v422 = vld [vmem:[%s355] sm:$0xf]
        %v423 = vld [vmem:[%s355 + $0x4] sm:$0xf]
        %v424 = vld [vmem:[%s355 + $0x8] sm:$0xf]
        %v425 = vld [vmem:[%s355 + $0xc] sm:$0xf]
        %v426 = vld [vmem:[%s355 + $0x10] sm:$0xf]
        %v427 = vld [vmem:[%s355 + $0x14] sm:$0xf]
        %v428 = vld [vmem:[%s355 + $0x18] sm:$0xf]
        %v429 = vld [vmem:[%s355 + $0x1c] sm:$0xf]
        %v430 = vld [vmem:[%s355 + $0x20] sm:$0xf]
        %v431 = vld [vmem:[%s355 + $0x24] sm:$0xf]
        %v432 = vld [vmem:[%s355 + $0x28] sm:$0xf]
        %v433 = vld [vmem:[%s355 + $0x2c] sm:$0xf]
        %v434 = vld [vmem:[%s355 + $0x30] sm:$0xf]
        %v435 = vld [vmem:[%s355 + $0x34] sm:$0xf]
        %v436 = vld [vmem:[%s355 + $0x38] sm:$0xf]
        %v437 = vld [vmem:[%s355 + $0x3c] sm:$0xf]
        %v454 = vunpack.c.l.b16 %v406
        %v455 = vunpack.c.l.b16 %v407
        %v456 = vunpack.c.l.b16 %v408
        %v457 = vunpack.c.l.b16 %v409
        %v458 = vunpack.c.l.b16 %v410
        %v459 = vunpack.c.l.b16 %v411
        %v460 = vunpack.c.l.b16 %v412
        %v461 = vunpack.c.l.b16 %v413
        %v462 = vunpack.c.l.b16 %v414
        %v463 = vunpack.c.l.b16 %v415
        %v464 = vunpack.c.l.b16 %v416
        %v465 = vunpack.c.l.b16 %v417
        %v466 = vunpack.c.l.b16 %v418
        %v467 = vunpack.c.l.b16 %v419
        %v468 = vunpack.c.l.b16 %v420
        %v469 = vunpack.c.l.b16 %v421
        %v470 = vpack.c.b16 %v455, %v454
        %v471 = vpack.c.b16 %v457, %v456
        %v472 = vpack.c.b16 %v459, %v458
        %v473 = vpack.c.b16 %v461, %v460
        %v474 = vpack.c.b16 %v463, %v462
        %v475 = vpack.c.b16 %v465, %v464
        %v476 = vpack.c.b16 %v467, %v466
        %v477 = vpack.c.b16 %v469, %v468
        %v502 = vunpack.c.l.b16 %v422
        %v503 = vunpack.c.l.b16 %v423
        %v504 = vunpack.c.l.b16 %v424
        %v505 = vunpack.c.l.b16 %v425
        %v506 = vunpack.c.l.b16 %v426
        %v507 = vunpack.c.l.b16 %v427
        %v508 = vunpack.c.l.b16 %v428
        %v509 = vunpack.c.l.b16 %v429
        %v510 = vunpack.c.l.b16 %v430
        %v511 = vunpack.c.l.b16 %v431
        %v512 = vunpack.c.l.b16 %v432
        %v513 = vunpack.c.l.b16 %v433
        %v514 = vunpack.c.l.b16 %v434
        %v515 = vunpack.c.l.b16 %v435
        %v516 = vunpack.c.l.b16 %v436
        %v517 = vunpack.c.l.b16 %v437
        %v518 = vpack.c.b16 %v503, %v502
        %v519 = vpack.c.b16 %v505, %v504
        %v520 = vpack.c.b16 %v507, %v506
        %v521 = vpack.c.b16 %v509, %v508
        %v522 = vpack.c.b16 %v511, %v510
        %v523 = vpack.c.b16 %v513, %v512
        %v524 = vpack.c.b16 %v515, %v514
        %v525 = vpack.c.b16 %v517, %v516
        %534 = vmatprep.subr.bf16.mxu0 0
        %535 = vmatpush1.bf16.msra.mxu0 %v518
        %536 = vmatprep.subr.bf16.mxu0 0
        %537 = vmatpush1.bf16.msra.mxu0 %v519
        %538 = vmatprep.subr.bf16.mxu0 0
        %539 = vmatpush1.bf16.msra.mxu0 %v520
        %540 = vmatprep.subr.bf16.mxu0 0
        %541 = vmatpush1.bf16.msra.mxu0 %v521
        %542 = vmatprep.subr.bf16.mxu0 0
        %543 = vmatpush1.bf16.msra.mxu0 %v522
        %544 = vmatprep.subr.bf16.mxu0 0
        %545 = vmatpush1.bf16.msra.mxu0 %v523
        %546 = vmatprep.subr.bf16.mxu0 0
        %547 = vmatpush1.bf16.msra.mxu0 %v524
        %548 = vmatprep.subr.bf16.mxu0 0
        %549 = vmatpush1.bf16.msra.mxu0 %v525
        %550 = vmatprep.subr.bf16.mxu0 0
        %551 = vmatpush1.bf16.msra.mxu0 0
        %552 = vmatprep.subr.bf16.mxu0 0
        %553 = vmatpush1.bf16.msra.mxu0 0
        %554 = vmatprep.subr.bf16.mxu0 0
        %555 = vmatpush1.bf16.msra.mxu0 0
        %556 = vmatprep.subr.bf16.mxu0 0
        %557 = vmatpush1.bf16.msra.mxu0 0
        %558 = vmatprep.subr.bf16.mxu0 0
        %559 = vmatpush1.bf16.msra.mxu0 0
        %560 = vmatprep.subr.bf16.mxu0 0
        %561 = vmatpush1.bf16.msra.mxu0 0
        %562 = vmatprep.subr.bf16.mxu0 0
        %563 = vmatpush1.bf16.msra.mxu0 0
        %564 = vmatprep.subr.bf16.mxu0 0
        %565 = vmatpush1.bf16.msra.mxu0 0
        %566 = vmatprep.mubr.bf16.mxu0 0
        %567 = vmatmul.mubr.bf16.gmra.mrb[0].mxu0 %v470
        %v568 = vpop.f32.mrb[0].mxu0
        %v569 = vadd.f32 0.0, %v568
        %v570 = vpop.f32.mrb[0].mxu0
        %v571 = vpop.f32.mrb[0].mxu0
        %v572 = vadd.f32 0.0, %v571
        %v573 = vpop.f32.mrb[0].mxu0
        %574 = vmatprep.mubr.bf16.mxu0 0
        %575 = vmatmul.mubr.bf16.gmra.mrb[0].mxu0 %v471
        %v576 = vpop.f32.mrb[0].mxu0
        %v577 = vadd.f32 0.0, %v576
        %v578 = vpop.f32.mrb[0].mxu0
        %v579 = vpop.f32.mrb[0].mxu0
        %v580 = vadd.f32 0.0, %v579
        %v581 = vpop.f32.mrb[0].mxu0
        %582 = vmatprep.mubr.bf16.mxu0 0
        %583 = vmatmul.mubr.bf16.gmra.mrb[0].mxu0 %v472
        %v584 = vpop.f32.mrb[0].mxu0
        %v585 = vadd.f32 0.0, %v584
        %v586 = vpop.f32.mrb[0].mxu0
        %v587 = vpop.f32.mrb[0].mxu0
        %v588 = vadd.f32 0.0, %v587
        %v589 = vpop.f32.mrb[0].mxu0
        %590 = vmatprep.mubr.bf16.mxu0 0
        %591 = vmatmul.mubr.bf16.gmra.mrb[0].mxu0 %v473
        %v592 = vpop.f32.mrb[0].mxu0
        %v593 = vadd.f32 0.0, %v592
        %v594 = vpop.f32.mrb[0].mxu0
        %v595 = vpop.f32.mrb[0].mxu0
        %v596 = vadd.f32 0.0, %v595
        %v597 = vpop.f32.mrb[0].mxu0
        %598 = vmatprep.mubr.bf16.mxu0 0
        %599 = vmatmul.mubr.bf16.gmra.mrb[0].mxu0 %v474
        %v600 = vpop.f32.mrb[0].mxu0
        %v601 = vadd.f32 0.0, %v600
        %v602 = vpop.f32.mrb[0].mxu0
        %v603 = vpop.f32.mrb[0].mxu0
        %v604 = vadd.f32 0.0, %v603
        %v605 = vpop.f32.mrb[0].mxu0
        %606 = vmatprep.mubr.bf16.mxu0 0
        %607 = vmatmul.mubr.bf16.gmra.mrb[0].mxu0 %v475
        %v608 = vpop.f32.mrb[0].mxu0
        %v609 = vadd.f32 0.0, %v608
        %v610 = vpop.f32.mrb[0].mxu0
        %v611 = vpop.f32.mrb[0].mxu0
        %v612 = vadd.f32 0.0, %v611
        %v613 = vpop.f32.mrb[0].mxu0
        %614 = vmatprep.mubr.bf16.mxu0 0
        %615 = vmatmul.mubr.bf16.gmra.mrb[0].mxu0 %v476
        %v616 = vpop.f32.mrb[0].mxu0
        %v617 = vadd.f32 0.0, %v616
        %v618 = vpop.f32.mrb[0].mxu0
        %v619 = vpop.f32.mrb[0].mxu0
        %v620 = vadd.f32 0.0, %v619
        %v621 = vpop.f32.mrb[0].mxu0
        %622 = vmatprep.mubr.bf16.mxu0 0
        %623 = vmatmul.mubr.bf16.gmra.mrb[0].mxu0 %v477
        %v624 = vpop.f32.mrb[0].mxu0
        %v625 = vadd.f32 0.0, %v624
        %v626 = vpop.f32.mrb[0].mxu0
        %v627 = vpop.f32.mrb[0].mxu0
        %v628 = vadd.f32 0.0, %v627
        %v629 = vpop.f32.mrb[0].mxu0
        %630 = vdwg.mxu0
        %v631 = vadd.f32 %v390, %v569
        %v632 = vadd.f32 %v391, %v572
        %v633 = vadd.f32 %v392, %v577
        %v634 = vadd.f32 %v393, %v580
        %v635 = vadd.f32 %v394, %v585
        %v636 = vadd.f32 %v395, %v588
        %v637 = vadd.f32 %v396, %v593
        %v638 = vadd.f32 %v397, %v596
        %v639 = vadd.f32 %v398, %v601
        %v640 = vadd.f32 %v399, %v604
        %v641 = vadd.f32 %v400, %v609
        %v642 = vadd.f32 %v401, %v612
        %v643 = vadd.f32 %v402, %v617
        %v644 = vadd.f32 %v403, %v620
        %v645 = vadd.f32 %v404, %v625
        %v646 = vadd.f32 %v405, %v628
        %647 = vst [vmem:[#allocation2] sm:$0xff] %v631
        %648 = vst [vmem:[#allocation2 + $0x8] sm:$0xff] %v632
        %649 = vst [vmem:[#allocation2 + $0x10] sm:$0xff] %v633
        %650 = vst [vmem:[#allocation2 + $0x18] sm:$0xff] %v634
        %651 = vst [vmem:[#allocation2 + $0x20] sm:$0xff] %v635
        %652 = vst [vmem:[#allocation2 + $0x28] sm:$0xff] %v636
        %653 = vst [vmem:[#allocation2 + $0x30] sm:$0xff] %v637
        %654 = vst [vmem:[#allocation2 + $0x38] sm:$0xff] %v638
        %655 = vst [vmem:[#allocation2 + $0x40] sm:$0xff] %v639
        %656 = vst [vmem:[#allocation2 + $0x48] sm:$0xff] %v640
        %657 = vst [vmem:[#allocation2 + $0x50] sm:$0xff] %v641
        %658 = vst [vmem:[#allocation2 + $0x58] sm:$0xff] %v642
        %659 = vst [vmem:[#allocation2 + $0x60] sm:$0xff] %v643
        %660 = vst [vmem:[#allocation2 + $0x68] sm:$0xff] %v644
        %661 = vst [vmem:[#allocation2 + $0x70] sm:$0xff] %v645
        %662 = vst [vmem:[#allocation2 + $0x78] sm:$0xff] %v646
        %p663 = scmp.eq.s32.totalorder %s27, 1
        // Predicated region
        $region82: #{gcnii_forward.5} parent=72 // pred_check
          %p664 = pneg %p663
        $region83: #{gcnii_forward.5} parent=72 // pred_check_branch
          %666 = sbr.rel (%p664) target = $region85
        $region84: #{gcnii_forward.5} parent=72 // pred_region
          %s667 = sld [smem:[#allocation4]]
          %s668 = sld [smem:[#allocation4 + $0x1]]
          %s669 = ssub.f32 1.0, %s668
          %v670 = vld [vmem:[#allocation2] sm:$0xff]
          %v671 = vld [vmem:[#allocation2 + $0x8] sm:$0xff]
          %v672 = vld [vmem:[#allocation2 + $0x10] sm:$0xff]
          %v673 = vld [vmem:[#allocation2 + $0x18] sm:$0xff]
          %v674 = vld [vmem:[#allocation2 + $0x20] sm:$0xff]
          %v675 = vld [vmem:[#allocation2 + $0x28] sm:$0xff]
          %v676 = vld [vmem:[#allocation2 + $0x30] sm:$0xff]
          %v677 = vld [vmem:[#allocation2 + $0x38] sm:$0xff]
          %v678 = vld [vmem:[#allocation2 + $0x40] sm:$0xff]
          %v679 = vld [vmem:[#allocation2 + $0x48] sm:$0xff]
          %v680 = vld [vmem:[#allocation2 + $0x50] sm:$0xff]
          %v681 = vld [vmem:[#allocation2 + $0x58] sm:$0xff]
          %v682 = vld [vmem:[#allocation2 + $0x60] sm:$0xff]
          %v683 = vld [vmem:[#allocation2 + $0x68] sm:$0xff]
          %v684 = vld [vmem:[#allocation2 + $0x70] sm:$0xff]
          %v685 = vld [vmem:[#allocation2 + $0x78] sm:$0xff]
          %v686 = vstv %s669
          %v687 = vmul.f32 %v686, %v670
          %v688 = vmul.f32 %v686, %v671
          %v689 = vmul.f32 %v686, %v672
          %v690 = vmul.f32 %v686, %v673
          %v691 = vmul.f32 %v686, %v674
          %v692 = vmul.f32 %v686, %v675
          %v693 = vmul.f32 %v686, %v676
          %v694 = vmul.f32 %v686, %v677
          %v695 = vmul.f32 %v686, %v678
          %v696 = vmul.f32 %v686, %v679
          %v697 = vmul.f32 %v686, %v680
          %v698 = vmul.f32 %v686, %v681
          %v699 = vmul.f32 %v686, %v682
          %v700 = vmul.f32 %v686, %v683
          %v701 = vmul.f32 %v686, %v684
          %v702 = vmul.f32 %v686, %v685
          %v703 = vld [vmem:[%s361] sm:$0xf]
          %v704 = vld [vmem:[%s361 + $0x4] sm:$0xf]
          %v705 = vld [vmem:[%s361 + $0x8] sm:$0xf]
          %v706 = vld [vmem:[%s361 + $0xc] sm:$0xf]
          %v707 = vld [vmem:[%s361 + $0x10] sm:$0xf]
          %v708 = vld [vmem:[%s361 + $0x14] sm:$0xf]
          %v709 = vld [vmem:[%s361 + $0x18] sm:$0xf]
          %v710 = vld [vmem:[%s361 + $0x1c] sm:$0xf]
          %v711 = vld [vmem:[%s361 + $0x20] sm:$0xf]
          %v712 = vld [vmem:[%s361 + $0x24] sm:$0xf]
          %v713 = vld [vmem:[%s361 + $0x28] sm:$0xf]
          %v714 = vld [vmem:[%s361 + $0x2c] sm:$0xf]
          %v715 = vld [vmem:[%s361 + $0x30] sm:$0xf]
          %v716 = vld [vmem:[%s361 + $0x34] sm:$0xf]
          %v717 = vld [vmem:[%s361 + $0x38] sm:$0xf]
          %v718 = vld [vmem:[%s361 + $0x3c] sm:$0xf]
          %v719 = vunpack.c.l.bf16 %v703
          %v720 = vunpack.c.l.bf16 %v704
          %v721 = vunpack.c.l.bf16 %v705
          %v722 = vunpack.c.l.bf16 %v706
          %v723 = vunpack.c.l.bf16 %v707
          %v724 = vunpack.c.l.bf16 %v708
          %v725 = vunpack.c.l.bf16 %v709
          %v726 = vunpack.c.l.bf16 %v710
          %v727 = vunpack.c.l.bf16 %v711
          %v728 = vunpack.c.l.bf16 %v712
          %v729 = vunpack.c.l.bf16 %v713
          %v730 = vunpack.c.l.bf16 %v714
          %v731 = vunpack.c.l.bf16 %v715
          %v732 = vunpack.c.l.bf16 %v716
          %v733 = vunpack.c.l.bf16 %v717
          %v734 = vunpack.c.l.bf16 %v718
          %v735 = vstv %s668
          %v736 = vmul.f32 %v735, %v719
          %v737 = vmul.f32 %v735, %v720
          %v738 = vmul.f32 %v735, %v721
          %v739 = vmul.f32 %v735, %v722
          %v740 = vmul.f32 %v735, %v723
          %v741 = vmul.f32 %v735, %v724
          %v742 = vmul.f32 %v735, %v725
          %v743 = vmul.f32 %v735, %v726
          %v744 = vmul.f32 %v735, %v727
          %v745 = vmul.f32 %v735, %v728
          %v746 = vmul.f32 %v735, %v729
          %v747 = vmul.f32 %v735, %v730
          %v748 = vmul.f32 %v735, %v731
          %v749 = vmul.f32 %v735, %v732
          %v750 = vmul.f32 %v735, %v733
          %v751 = vmul.f32 %v735, %v734
          %v752 = vadd.f32 %v687, %v736
          %v753 = vadd.f32 %v688, %v737
          %v754 = vadd.f32 %v689, %v738
          %v755 = vadd.f32 %v690, %v739
          %v756 = vadd.f32 %v691, %v740
          %v757 = vadd.f32 %v692, %v741
          %v758 = vadd.f32 %v693, %v742
          %v759 = vadd.f32 %v694, %v743
          %v760 = vadd.f32 %v695, %v744
          %v761 = vadd.f32 %v696, %v745
          %v762 = vadd.f32 %v697, %v746
          %v763 = vadd.f32 %v698, %v747
          %v764 = vadd.f32 %v699, %v748
          %v765 = vadd.f32 %v700, %v749
          %v766 = vadd.f32 %v701, %v750
          %v767 = vadd.f32 %v702, %v751
          %v768 = vpack.c.bf16 %v753, %v752
          %v769 = vpack.c.bf16 %v755, %v754
          %v770 = vpack.c.bf16 %v757, %v756
          %v771 = vpack.c.bf16 %v759, %v758
          %v772 = vpack.c.bf16 %v761, %v760
          %v773 = vpack.c.bf16 %v763, %v762
          %v774 = vpack.c.bf16 %v765, %v764
          %v775 = vpack.c.bf16 %v767, %v766
          %v776 = vld [vmem:[%s4] sm:$0xf]
          %v777 = vld [vmem:[%s4 + $0x4] sm:$0xf]
          %v778 = vld [vmem:[%s4 + $0x8] sm:$0xf]
          %v779 = vld [vmem:[%s4 + $0xc] sm:$0xf]
          %v780 = vld [vmem:[%s4 + $0x10] sm:$0xf]
          %v781 = vld [vmem:[%s4 + $0x14] sm:$0xf]
          %v782 = vld [vmem:[%s4 + $0x18] sm:$0xf]
          %v783 = vld [vmem:[%s4 + $0x1c] sm:$0xf]
          %v784 = vld [vmem:[%s4 + $0x20] sm:$0xf]
          %v785 = vld [vmem:[%s4 + $0x24] sm:$0xf]
          %v786 = vld [vmem:[%s4 + $0x28] sm:$0xf]
          %v787 = vld [vmem:[%s4 + $0x2c] sm:$0xf]
          %v788 = vld [vmem:[%s4 + $0x30] sm:$0xf]
          %v789 = vld [vmem:[%s4 + $0x34] sm:$0xf]
          %v790 = vld [vmem:[%s4 + $0x38] sm:$0xf]
          %v791 = vld [vmem:[%s4 + $0x3c] sm:$0xf]
          %v808 = vunpack.c.l.b16 %v776
          %v809 = vunpack.c.l.b16 %v777
          %v810 = vunpack.c.l.b16 %v778
          %v811 = vunpack.c.l.b16 %v779
          %v812 = vunpack.c.l.b16 %v780
          %v813 = vunpack.c.l.b16 %v781
          %v814 = vunpack.c.l.b16 %v782
          %v815 = vunpack.c.l.b16 %v783
          %v816 = vunpack.c.l.b16 %v784
          %v817 = vunpack.c.l.b16 %v785
          %v818 = vunpack.c.l.b16 %v786
          %v819 = vunpack.c.l.b16 %v787
          %v820 = vunpack.c.l.b16 %v788
          %v821 = vunpack.c.l.b16 %v789
          %v822 = vunpack.c.l.b16 %v790
          %v823 = vunpack.c.l.b16 %v791
          %v824 = vpack.c.b16 %v809, %v808
          %v825 = vpack.c.b16 %v811, %v810
          %v826 = vpack.c.b16 %v813, %v812
          %v827 = vpack.c.b16 %v815, %v814
          %v828 = vpack.c.b16 %v817, %v816
          %v829 = vpack.c.b16 %v819, %v818
          %v830 = vpack.c.b16 %v821, %v820
          %v831 = vpack.c.b16 %v823, %v822
          %840 = vmatprep.subr.bf16.mxu0 0
          %841 = vmatpush1.bf16.msra.mxu0 %v824
          %842 = vmatprep.subr.bf16.mxu0 0
          %843 = vmatpush1.bf16.msra.mxu0 %v825
          %844 = vmatprep.subr.bf16.mxu0 0
          %845 = vmatpush1.bf16.msra.mxu0 %v826
          %846 = vmatprep.subr.bf16.mxu0 0
          %847 = vmatpush1.bf16.msra.mxu0 %v827
          %848 = vmatprep.subr.bf16.mxu0 0
          %849 = vmatpush1.bf16.msra.mxu0 %v828
          %850 = vmatprep.subr.bf16.mxu0 0
          %851 = vmatpush1.bf16.msra.mxu0 %v829
          %852 = vmatprep.subr.bf16.mxu0 0
          %853 = vmatpush1.bf16.msra.mxu0 %v830
          %854 = vmatprep.subr.bf16.mxu0 0
          %855 = vmatpush1.bf16.msra.mxu0 %v831
          %856 = vmatprep.subr.bf16.mxu0 0
          %857 = vmatpush1.bf16.msra.mxu0 0
          %858 = vmatprep.subr.bf16.mxu0 0
          %859 = vmatpush1.bf16.msra.mxu0 0
          %860 = vmatprep.subr.bf16.mxu0 0
          %861 = vmatpush1.bf16.msra.mxu0 0
          %862 = vmatprep.subr.bf16.mxu0 0
          %863 = vmatpush1.bf16.msra.mxu0 0
          %864 = vmatprep.subr.bf16.mxu0 0
          %865 = vmatpush1.bf16.msra.mxu0 0
          %866 = vmatprep.subr.bf16.mxu0 0
          %867 = vmatpush1.bf16.msra.mxu0 0
          %868 = vmatprep.subr.bf16.mxu0 0
          %869 = vmatpush1.bf16.msra.mxu0 0
          %870 = vmatprep.subr.bf16.mxu0 0
          %871 = vmatpush1.bf16.msra.mxu0 0
          %872 = vmatprep.mubr.bf16.mxu0 0
          %873 = vmatmul.mubr.bf16.gmra.mrb[0].mxu0 %v768
          %v874 = vpop.f32.mrb[0].mxu0
          %v875 = vadd.f32 0.0, %v874
          %v876 = vpop.f32.mrb[0].mxu0
          %v877 = vpop.f32.mrb[0].mxu0
          %v878 = vadd.f32 0.0, %v877
          %v879 = vpop.f32.mrb[0].mxu0
          %880 = vmatprep.mubr.bf16.mxu0 0
          %881 = vmatmul.mubr.bf16.gmra.mrb[0].mxu0 %v769
          %v882 = vpop.f32.mrb[0].mxu0
          %v883 = vadd.f32 0.0, %v882
          %v884 = vpop.f32.mrb[0].mxu0
          %v885 = vpop.f32.mrb[0].mxu0
          %v886 = vadd.f32 0.0, %v885
          %v887 = vpop.f32.mrb[0].mxu0
          %888 = vmatprep.mubr.bf16.mxu0 0
          %889 = vmatmul.mubr.bf16.gmra.mrb[0].mxu0 %v770
          %v890 = vpop.f32.mrb[0].mxu0
          %v891 = vadd.f32 0.0, %v890
          %v892 = vpop.f32.mrb[0].mxu0
          %v893 = vpop.f32.mrb[0].mxu0
          %v894 = vadd.f32 0.0, %v893
          %v895 = vpop.f32.mrb[0].mxu0
          %896 = vmatprep.mubr.bf16.mxu0 0
          %897 = vmatmul.mubr.bf16.gmra.mrb[0].mxu0 %v771
          %v898 = vpop.f32.mrb[0].mxu0
          %v899 = vadd.f32 0.0, %v898
          %v900 = vpop.f32.mrb[0].mxu0
          %v901 = vpop.f32.mrb[0].mxu0
          %v902 = vadd.f32 0.0, %v901
          %v903 = vpop.f32.mrb[0].mxu0
          %904 = vmatprep.mubr.bf16.mxu0 0
          %905 = vmatmul.mubr.bf16.gmra.mrb[0].mxu0 %v772
          %v906 = vpop.f32.mrb[0].mxu0
          %v907 = vadd.f32 0.0, %v906
          %v908 = vpop.f32.mrb[0].mxu0
          %v909 = vpop.f32.mrb[0].mxu0
          %v910 = vadd.f32 0.0, %v909
          %v911 = vpop.f32.mrb[0].mxu0
          %912 = vmatprep.mubr.bf16.mxu0 0
          %913 = vmatmul.mubr.bf16.gmra.mrb[0].mxu0 %v773
          %v914 = vpop.f32.mrb[0].mxu0
          %v915 = vadd.f32 0.0, %v914
          %v916 = vpop.f32.mrb[0].mxu0
          %v917 = vpop.f32.mrb[0].mxu0
          %v918 = vadd.f32 0.0, %v917
          %v919 = vpop.f32.mrb[0].mxu0
          %920 = vmatprep.mubr.bf16.mxu0 0
          %921 = vmatmul.mubr.bf16.gmra.mrb[0].mxu0 %v774
          %v922 = vpop.f32.mrb[0].mxu0
          %v923 = vadd.f32 0.0, %v922
          %v924 = vpop.f32.mrb[0].mxu0
          %v925 = vpop.f32.mrb[0].mxu0
          %v926 = vadd.f32 0.0, %v925
          %v927 = vpop.f32.mrb[0].mxu0
          %928 = vmatprep.mubr.bf16.mxu0 0
          %929 = vmatmul.mubr.bf16.gmra.mrb[0].mxu0 %v775
          %v930 = vpop.f32.mrb[0].mxu0
          %v931 = vadd.f32 0.0, %v930
          %v932 = vpop.f32.mrb[0].mxu0
          %v933 = vpop.f32.mrb[0].mxu0
          %v934 = vadd.f32 0.0, %v933
          %v935 = vpop.f32.mrb[0].mxu0
          %936 = vdwg.mxu0
          %v937 = vstv %s667
          %v938 = vmul.f32 %v937, %v875
          %v939 = vmul.f32 %v937, %v878
          %v940 = vmul.f32 %v937, %v883
          %v941 = vmul.f32 %v937, %v886
          %v942 = vmul.f32 %v937, %v891
          %v943 = vmul.f32 %v937, %v894
          %v944 = vmul.f32 %v937, %v899
          %v945 = vmul.f32 %v937, %v902
          %v946 = vmul.f32 %v937, %v907
          %v947 = vmul.f32 %v937, %v910
          %v948 = vmul.f32 %v937, %v915
          %v949 = vmul.f32 %v937, %v918
          %v950 = vmul.f32 %v937, %v923
          %v951 = vmul.f32 %v937, %v926
          %v952 = vmul.f32 %v937, %v931
          %v953 = vmul.f32 %v937, %v934
          %s954 = ssub.f32 1.0, %s667
          %v955 = vstv %s954
          %v956 = vmul.f32 %v955, %v752
          %v957 = vmul.f32 %v955, %v753
          %v958 = vmul.f32 %v955, %v754
          %v959 = vmul.f32 %v955, %v755
          %v960 = vmul.f32 %v955, %v756
          %v961 = vmul.f32 %v955, %v757
          %v962 = vmul.f32 %v955, %v758
          %v963 = vmul.f32 %v955, %v759
          %v964 = vmul.f32 %v955, %v760
          %v965 = vmul.f32 %v955, %v761
          %v966 = vmul.f32 %v955, %v762
          %v967 = vmul.f32 %v955, %v763
          %v968 = vmul.f32 %v955, %v764
          %v969 = vmul.f32 %v955, %v765
          %v970 = vmul.f32 %v955, %v766
          %v971 = vmul.f32 %v955, %v767
          %v972 = vadd.f32 %v938, %v956
          %v973 = vadd.f32 %v939, %v957
          %v974 = vadd.f32 %v940, %v958
          %v975 = vadd.f32 %v941, %v959
          %v976 = vadd.f32 %v942, %v960
          %v977 = vadd.f32 %v943, %v961
          %v978 = vadd.f32 %v944, %v962
          %v979 = vadd.f32 %v945, %v963
          %v980 = vadd.f32 %v946, %v964
          %v981 = vadd.f32 %v947, %v965
          %v982 = vadd.f32 %v948, %v966
          %v983 = vadd.f32 %v949, %v967
          %v984 = vadd.f32 %v950, %v968
          %v985 = vadd.f32 %v951, %v969
          %v986 = vadd.f32 %v952, %v970
          %v987 = vadd.f32 %v953, %v971
          %v988 = vmax.f32 %v972, 0.0
          %v989 = vmax.f32 %v973, 0.0
          %v990 = vmax.f32 %v974, 0.0
          %v991 = vmax.f32 %v975, 0.0
          %v992 = vmax.f32 %v976, 0.0
          %v993 = vmax.f32 %v977, 0.0
          %v994 = vmax.f32 %v978, 0.0
          %v995 = vmax.f32 %v979, 0.0
          %v996 = vmax.f32 %v980, 0.0
          %v997 = vmax.f32 %v981, 0.0
          %v998 = vmax.f32 %v982, 0.0
          %v999 = vmax.f32 %v983, 0.0
          %v1000 = vmax.f32 %v984, 0.0
          %v1001 = vmax.f32 %v985, 0.0
          %v1002 = vmax.f32 %v986, 0.0
          %v1003 = vmax.f32 %v987, 0.0
          %v1004 = vpack.c.bf16 %v989, %v988
          %v1005 = vpack.c.bf16 %v991, %v990
          %v1006 = vpack.c.bf16 %v993, %v992
          %v1007 = vpack.c.bf16 %v995, %v994
          %v1008 = vpack.c.bf16 %v997, %v996
          %v1009 = vpack.c.bf16 %v999, %v998
          %v1010 = vpack.c.bf16 %v1001, %v1000
          %v1011 = vpack.c.bf16 %v1003, %v1002
          %v1020 = vunpack.c.l.b16 %v1004
          %v1021 = vunpack.c.h.b16 %v1004
          %v1022 = vunpack.c.l.b16 %v1005
          %v1023 = vunpack.c.h.b16 %v1005
          %v1024 = vunpack.c.l.b16 %v1006
          %v1025 = vunpack.c.h.b16 %v1006
          %v1026 = vunpack.c.l.b16 %v1007
          %v1027 = vunpack.c.h.b16 %v1007
          %v1028 = vunpack.c.l.b16 %v1008
          %v1029 = vunpack.c.h.b16 %v1008
          %v1030 = vunpack.c.l.b16 %v1009
          %v1031 = vunpack.c.h.b16 %v1009
          %v1032 = vunpack.c.l.b16 %v1010
          %v1033 = vunpack.c.h.b16 %v1010
          %v1034 = vunpack.c.l.b16 %v1011
          %v1035 = vunpack.c.h.b16 %v1011
          %v1036 = vpack.c.b16 %v1020, %v1020
          %v1037 = vpack.c.b16 %v1021, %v1021
          %v1038 = vpack.c.b16 %v1022, %v1022
          %v1039 = vpack.c.b16 %v1023, %v1023
          %v1040 = vpack.c.b16 %v1024, %v1024
          %v1041 = vpack.c.b16 %v1025, %v1025
          %v1042 = vpack.c.b16 %v1026, %v1026
          %v1043 = vpack.c.b16 %v1027, %v1027
          %v1044 = vpack.c.b16 %v1028, %v1028
          %v1045 = vpack.c.b16 %v1029, %v1029
          %v1046 = vpack.c.b16 %v1030, %v1030
          %v1047 = vpack.c.b16 %v1031, %v1031
          %v1048 = vpack.c.b16 %v1032, %v1032
          %v1049 = vpack.c.b16 %v1033, %v1033
          %v1050 = vpack.c.b16 %v1034, %v1034
          %v1051 = vpack.c.b16 %v1035, %v1035
          %1068 = vst [vmem:[%s367] sm:$0xf] %v1036
          %1069 = vst [vmem:[%s367 + $0x4] sm:$0xf] %v1037
          %1070 = vst [vmem:[%s367 + $0x8] sm:$0xf] %v1038
          %1071 = vst [vmem:[%s367 + $0xc] sm:$0xf] %v1039
          %1072 = vst [vmem:[%s367 + $0x10] sm:$0xf] %v1040
          %1073 = vst [vmem:[%s367 + $0x14] sm:$0xf] %v1041
          %1074 = vst [vmem:[%s367 + $0x18] sm:$0xf] %v1042
          %1075 = vst [vmem:[%s367 + $0x1c] sm:$0xf] %v1043
          %1076 = vst [vmem:[%s367 + $0x20] sm:$0xf] %v1044
          %1077 = vst [vmem:[%s367 + $0x24] sm:$0xf] %v1045
          %1078 = vst [vmem:[%s367 + $0x28] sm:$0xf] %v1046
          %1079 = vst [vmem:[%s367 + $0x2c] sm:$0xf] %v1047
          %1080 = vst [vmem:[%s367 + $0x30] sm:$0xf] %v1048
          %1081 = vst [vmem:[%s367 + $0x34] sm:$0xf] %v1049
          %1082 = vst [vmem:[%s367 + $0x38] sm:$0xf] %v1050
          %1083 = vst [vmem:[%s367 + $0x3c] sm:$0xf] %v1051
        $region85: #{gcnii_forward.5} parent=72 // pred_fallthru
          _
        %s1084 = smul.u32 16, %s26
        %p1085 = scmp.lt.s32.totalorder %s1084, 31
        %s1086 = scalar_select %p1085, %s1084, 31
        %s1087 = smul.addr %s1086, 4
        %s1088 = scalar_lea.vmem %s5, %s1087
        // Predicated region
        $region86: #{gcnii_forward.5} parent=72 // pred_check
          %p1089 = pneg %p153
        $region87: #{gcnii_forward.5} parent=72 // pred_check_branch
          %1091 = sbr.rel (%p1089) target = $region89
        $region88: #{gcnii_forward.5} parent=72 // pred_region
          %s1092 = smul.u32 16, %s26
        $region89: #{gcnii_forward.5} parent=72 // pred_fallthru
          _
      $region73: #{gcnii_forward.5} parent=5 // pred_fallthru
        _
      %p1093 = scmp.le.s32.totalorder 2, %s17
      // Predicated region
      $region90: #{gcnii_forward.5} parent=5 // pred_check
        %p1094 = pneg %p1093
      $region91: #{gcnii_forward.5} parent=5 // pred_check_branch
        %1096 = sbr.rel (%p1094) target = $region93
      $region92: #{gcnii_forward.5} parent=5 // pred_region
        %s1097 = ssub.s32 %s17, 2
        // Predicated region
        $region94: #{gcnii_forward.5} parent=92 // pred_check
          %p1098 = pneg %p159
        $region95: #{gcnii_forward.5} parent=92 // pred_check_branch
          %1100 = sbr.rel (%p1098) target = $region97
        $region96: #{gcnii_forward.5} parent=92 // pred_region
          %s1101 = smul.u32 16, %s28
          %p1102 = scmp.lt.s32.totalorder %s1101, 31
          %s1103 = scalar_select %p1102, %s1101, 31
          %s1104 = smul.addr %s1103, 4
          %s1105 = scalar_lea.vmem %s5, %s1104
        $region97: #{gcnii_forward.5} parent=92 // pred_fallthru
          _
      $region93: #{gcnii_forward.5} parent=5 // pred_fallthru
        _
    $region6: #{gcnii_forward.5} parent=1 // loop_footer
      %s21 = sadd.s32 1, %s17
    $region7: #{gcnii_forward.5} parent=1 // loop_footer_branch
      %16 = sbr.rel target = $region3
    $region8: #{gcnii_forward.5} parent=1 // loop_exit
      _

</llo_original>
